<compile_context>
chip_gen: v7x
topology: tpu7x:2x2x1
jax: 0.10.0
libtpu: 0.0.40
codegen_flags: <defaults>
</compile_context>

<pallas_src>
import jax
import jax.numpy as jnp
from jax.experimental import pallas as pl
from jax.experimental.pallas import tpu as pltpu

_MIN_T = 8


def _bucket_len(n):
    """Next power of two, at least _MIN_T (bounds recompilation to few buckets)."""
    n = max(int(n), 1)
    return max(_MIN_T, 1 << (n - 1).bit_length())


def _gru_value_kernel(len_ref, x_ref, wih_ref, whh_ref, bpre_ref, bhhn_ref,
                      fcw_ref, fcb_ref, out_ref, gi_ref):
    T_pad = x_ref.shape[0]
    HP = whh_ref.shape[0]          # padded per-gate hidden width (128)
    G2 = 2 * HP                    # start of the n-gate block (vreg boundary)

    L = len_ref[0]                 # true sequence length (SMEM scalar)

    # Input-side gate pre-activations for every timestep in ONE MXU matmul,
    # with b_ih and the r/z part of b_hh already folded in.
    gi_ref[...] = (jnp.dot(x_ref[...], wih_ref[...],
                           preferred_element_type=jnp.float32)
                   + bpre_ref[...])

    bhh_n = bhhn_ref[...]          # (1, HP), hoisted once

    # TODO(synk): for even lower per-step latency, hold w_hh resident in the MXU
    # via pltpu.matmul_push_rhs / matmul_acc_lhs instead of re-pushing per step.
    h = jnp.zeros((1, HP), jnp.float32)
    for t in range(T_pad):         # fully unrolled; all slices below are static
        gh = jnp.dot(h, whh_ref[...], preferred_element_type=jnp.float32)  # (1, 3HP)
        # Fused r|z sigmoid over the first two (vreg-aligned) gate blocks.
        rz = jax.nn.sigmoid(gi_ref[t:t + 1, :G2] + gh[:, :G2])             # (1, 2HP)
        r = rz[:, :HP]
        z = rz[:, HP:]
        n = jnp.tanh(gi_ref[t:t + 1, G2:] + r * (gh[:, G2:] + bhh_n))      # (1, HP)
        h_new = (1.0 - z) * n + z * h
        h = jnp.where(t < L, h_new, h)                                     # mask padded steps

    # fc(h): VPU multiply + lane reduction — no second MXU pass for an N=1 output.
    out_ref[...] = (jnp.sum(h * fcw_ref[...], axis=-1, keepdims=True)
                    + fcb_ref[...])


@jax.jit
def _run_gru_value(length, x_pad, w_ih_p, w_hh_p, b_pre, b_hh_n, fc_w_row, fc_b):
    T_pad, _ = x_pad.shape
    HP = w_hh_p.shape[0]
    vmem = pl.BlockSpec(memory_space=pltpu.MemorySpace.VMEM)
    smem = pl.BlockSpec(memory_space=pltpu.MemorySpace.SMEM)
    return pl.pallas_call(
        _gru_value_kernel,
        out_shape=jax.ShapeDtypeStruct((1, 1), jnp.float32),
        in_specs=[smem, vmem, vmem, vmem, vmem, vmem, vmem, vmem],
        out_specs=vmem,
        scratch_shapes=[pltpu.VMEM((T_pad, 3 * HP), jnp.float32)],
    )(length, x_pad, w_ih_p, w_hh_p, b_pre, b_hh_n, fc_w_row, fc_b)


class GRUValueParams:
    """Deterministic synthetic parameters matching the torch module shapes,
    plus a gate-padded, vreg-aligned layout consumed by the kernel."""

    def __init__(self, num_layers=64, embedding_dim=32, hidden_dim=64, seed=0):
        self.num_layers = num_layers
        self.embedding_dim = embedding_dim
        self.hidden_dim = hidden_dim
        H = hidden_dim
        HP = self.hidden_pad = ((max(H, 1) + 127) // 128) * 128   # 128 for H=64
        key = jax.random.PRNGKey(seed)
        ks = jax.random.split(key, 7)
        k = 1.0 / jnp.sqrt(H)
        u = lambda kk, shp, b: jax.random.uniform(kk, shp, jnp.float32, -b, b)

        # --- torch-layout parameters (used by the pure-JAX reference) --------
        self.embedding = jax.random.normal(
            ks[0], (num_layers, embedding_dim), jnp.float32)
        w_ih = u(ks[1], (3 * H, embedding_dim), k)   # torch (3H, E), gates [r|z|n]
        w_hh = u(ks[2], (3 * H, H), k)               # torch (3H, H)
        self.w_ih_t = w_ih.T                         # (E, 3H)
        self.w_hh_t = w_hh.T                         # (H, 3H)
        self.b_ih = u(ks[3], (1, 3 * H), k)
        self.b_hh = u(ks[4], (1, 3 * H), k)
        self.fc_w_t = u(ks[5], (H, 1), k)            # (H, 1)
        self.fc_b = u(ks[6], (1, 1), k)

        # --- kernel layout: each gate padded to HP lanes (vreg-aligned) ------
        def pad_gate_cols(a):                        # (rows, 3H) -> (rows, 3HP)
            parts = [a[:, g * H:(g + 1) * H] for g in range(3)]
            return jnp.concatenate(
                [jnp.pad(p, ((0, 0), (0, HP - H))) for p in parts], axis=-1)

        self.w_ih_p = pad_gate_cols(self.w_ih_t)                        # (E, 3HP)
        self.w_hh_p = pad_gate_cols(jnp.pad(self.w_hh_t,
                                            ((0, HP - H), (0, 0))))     # (HP, 3HP)
        b_ih_p = pad_gate_cols(self.b_ih)                               # (1, 3HP)
        b_hh_p = pad_gate_cols(self.b_hh)                               # (1, 3HP)
        # Fold b_hh for the r,z gates into the precomputed input-side gates;
        # the n-gate hh bias must stay inside r * (W_hn h + b_hn).
        self.b_pre = b_ih_p.at[:, :2 * HP].add(b_hh_p[:, :2 * HP])      # (1, 3HP)
        self.b_hh_n = b_hh_p[:, 2 * HP:]                                # (1, HP)
        self.fc_w_row = jnp.pad(self.fc_w_t.T, ((0, 0), (0, HP - H)))   # (1, HP)


def gru_value_forward(params: GRUValueParams, layer_seq):
    """Mirrors GRUValue.forward: returns value of shape (1, 1)."""
    if len(layer_seq) == 0:
        # torch path: a single zero embedding is fed through the GRU.
        x_emb = jnp.zeros((1, params.embedding_dim), jnp.float32)
    else:
        idx = jnp.asarray(layer_seq, dtype=jnp.int32)     # (T,)
        x_emb = jnp.take(params.embedding, idx, axis=0)   # (T, E) gather (JAX glue)
    L = int(x_emb.shape[0])
    T_pad = _bucket_len(L)
    x_pad = jnp.pad(x_emb, ((0, T_pad - L), (0, 0)))
    length = jnp.asarray([L], dtype=jnp.int32)
    return _run_gru_value(length, x_pad, params.w_ih_p, params.w_hh_p,
                          params.b_pre, params.b_hh_n,
                          params.fc_w_row, params.fc_b)


def _reference_forward(params: GRUValueParams, layer_seq):
    """Pure-JAX reference of the same math (for a sanity check)."""
    H = params.hidden_dim
    if len(layer_seq) == 0:
        x_emb = jnp.zeros((1, params.embedding_dim), jnp.float32)
    else:
        idx = jnp.asarray(layer_seq, dtype=jnp.int32)
        x_emb = jnp.take(params.embedding, idx, axis=0)
    h = jnp.zeros((1, H), jnp.float32)
    for t in range(x_emb.shape[0]):
        x_t = x_emb[t:t + 1]
        gi = x_t @ params.w_ih_t + params.b_ih
        gh = h @ params.w_hh_t + params.b_hh
        r = jax.nn.sigmoid(gi[:, :H] + gh[:, :H])
        z = jax.nn.sigmoid(gi[:, H:2 * H] + gh[:, H:2 * H])
        n = jnp.tanh(gi[:, 2 * H:] + r * gh[:, 2 * H:])
        h = (1.0 - z) * n + z * h
    return h @ params.fc_w_t + params.fc_b


if __name__ == "__main__":
    params = GRUValueParams(num_layers=64, embedding_dim=32, hidden_dim=64, seed=0)

    key = jax.random.PRNGKey(0)
    k1, k2 = jax.random.split(key)

    # Exact-bucket sequence (T = 8, no padded steps).
    seq8 = [int(i) for i in jax.random.randint(k1, (8,), 0, params.num_layers)]
    v8 = jax.block_until_ready(gru_value_forward(params, seq8))
    assert v8.shape == (1, 1)
    r8 = _reference_forward(params, seq8)
    assert jnp.allclose(v8, r8, atol=1e-4, rtol=1e-4), (v8, r8)

    # Non-power-of-two length (T = 20 -> bucket 32, exercises length masking).
    seq20 = [int(i) for i in jax.random.randint(k2, (20,), 0, params.num_layers)]
    v20 = jax.block_until_ready(gru_value_forward(params, seq20))
    r20 = _reference_forward(params, seq20)
    assert jnp.allclose(v20, r20, atol=1e-4, rtol=1e-4), (v20, r20)

    # Empty-sequence path (single zero-embedding GRU step), as in the torch module.
    v_empty = jax.block_until_ready(gru_value_forward(params, []))
    assert v_empty.shape == (1, 1)
    r_empty = _reference_forward(params, [])
    assert jnp.allclose(v_empty, r_empty, atol=1e-4, rtol=1e-4), (v_empty, r_empty)

    print("KERNEL_OK")
</pallas_src>

<mosaic_0001>
module attributes {stable_mosaic.version = 11 : i64} {
  func.func @_gru_value_kernel(%arg0: memref<1xi32, #tpu.memory_space<smem>>, %arg1: memref<8x32xf32, #tpu.memory_space<vmem>>, %arg2: memref<32x384xf32, #tpu.memory_space<vmem>>, %arg3: memref<128x384xf32, #tpu.memory_space<vmem>>, %arg4: memref<1x384xf32, #tpu.memory_space<vmem>>, %arg5: memref<1x128xf32, #tpu.memory_space<vmem>>, %arg6: memref<1x128xf32, #tpu.memory_space<vmem>>, %arg7: memref<1x1xf32, #tpu.memory_space<vmem>>, %arg8: memref<1x1xf32, #tpu.memory_space<vmem>>, %arg9: memref<8x384xf32, #tpu.memory_space<vmem>>) attributes {dimension_semantics = [], scalar_prefetch = 0 : i64, scratch_operands = 1 : i64, tpu.core_type = #tpu.core_type<tc>} {
    %c0 = arith.constant 0 : index
    %0 = memref.load %arg0[%c0] : memref<1xi32, #tpu.memory_space<smem>>
    %c0_0 = arith.constant 0 : index
    %c0_1 = arith.constant 0 : index
    %1 = vector.load %arg1[%c0_0, %c0_1] : memref<8x32xf32, #tpu.memory_space<vmem>>, vector<8x32xf32>
    %c0_2 = arith.constant 0 : index
    %c0_3 = arith.constant 0 : index
    %2 = vector.load %arg2[%c0_2, %c0_3] : memref<32x384xf32, #tpu.memory_space<vmem>>, vector<32x384xf32>
    %cst = arith.constant dense<0.000000e+00> : vector<8x384xf32>
    %3 = tpu.matmul %1, %2, %cst {dimension_numbers = #tpu.dot_dimension_numbers<[1], [0], [0], [1], [0, 0, 1, 1], [], []>} : vector<8x32xf32>, vector<32x384xf32>, vector<8x384xf32> -> vector<8x384xf32>
    %c0_4 = arith.constant 0 : index
    %c0_5 = arith.constant 0 : index
    %4 = vector.load %arg4[%c0_4, %c0_5] : memref<1x384xf32, #tpu.memory_space<vmem>>, vector<1x384xf32>
    %5 = vector.broadcast %4 : vector<1x384xf32> to vector<8x384xf32>
    %6 = arith.addf %3, %5 : vector<8x384xf32>
    %c0_6 = arith.constant 0 : index
    %c0_7 = arith.constant 0 : index
    %7 = vector.load %arg9[%c0_6, %c0_7] : memref<8x384xf32, #tpu.memory_space<vmem>>, vector<8x384xf32>
    tpu.vector_store %arg9[%c0_6, %c0_7], %6 {strides = array<i32>} : memref<8x384xf32, #tpu.memory_space<vmem>>, vector<8x384xf32>,
    %c0_8 = arith.constant 0 : index
    %c0_9 = arith.constant 0 : index
    %8 = vector.load %arg5[%c0_8, %c0_9] : memref<1x128xf32, #tpu.memory_space<vmem>>, vector<1x128xf32>
    %cst_10 = arith.constant 0.000000e+00 : f32
    %9 = vector.broadcast %cst_10 : f32 to vector<1x128xf32>
    %c0_11 = arith.constant 0 : index
    %c0_12 = arith.constant 0 : index
    %10 = vector.load %arg3[%c0_11, %c0_12] : memref<128x384xf32, #tpu.memory_space<vmem>>, vector<128x384xf32>
    %cst_13 = arith.constant dense<0.000000e+00> : vector<1x384xf32>
    %11 = tpu.matmul %9, %10, %cst_13 {dimension_numbers = #tpu.dot_dimension_numbers<[1], [0], [0], [1], [0, 0, 1, 1], [], []>} : vector<1x128xf32>, vector<128x384xf32>, vector<1x384xf32> -> vector<1x384xf32>
    %c0_14 = arith.constant 0 : index
    %c0_15 = arith.constant 0 : index
    %12 = vector.load %arg9[%c0_14, %c0_15] : memref<8x384xf32, #tpu.memory_space<vmem>>, vector<1x256xf32>
    %13 = vector.extract_strided_slice %11 {offsets = [0, 0], sizes = [1, 256], strides = [1, 1]} : vector<1x384xf32> to vector<1x256xf32>
    %14 = arith.addf %12, %13 : vector<1x256xf32>
    %15 = arith.negf %14 : vector<1x256xf32>
    %16 = math.exp %15 : vector<1x256xf32>
    %cst_16 = arith.constant 1.000000e+00 : f32
    %17 = vector.broadcast %cst_16 : f32 to vector<1x256xf32>
    %18 = arith.addf %17, %16 : vector<1x256xf32>
    %19 = arith.divf %17, %18 : vector<1x256xf32>
    %20 = vector.extract_strided_slice %19 {offsets = [0, 0], sizes = [1, 128], strides = [1, 1]} : vector<1x256xf32> to vector<1x128xf32>
    %21 = vector.extract_strided_slice %19 {offsets = [0, 128], sizes = [1, 128], strides = [1, 1]} : vector<1x256xf32> to vector<1x128xf32>
    %c0_17 = arith.constant 0 : index
    %c256 = arith.constant 256 : index
    %22 = vector.load %arg9[%c0_17, %c256] : memref<8x384xf32, #tpu.memory_space<vmem>>, vector<1x128xf32>
    %23 = vector.extract_strided_slice %11 {offsets = [0, 256], sizes = [1, 128], strides = [1, 1]} : vector<1x384xf32> to vector<1x128xf32>
    %24 = arith.addf %23, %8 : vector<1x128xf32>
    %25 = arith.mulf %20, %24 : vector<1x128xf32>
    %26 = arith.addf %22, %25 : vector<1x128xf32>
    %27 = math.tanh %26 : vector<1x128xf32>
    %cst_18 = arith.constant 1.000000e+00 : f32
    %28 = vector.broadcast %cst_18 : f32 to vector<1x128xf32>
    %29 = arith.subf %28, %21 : vector<1x128xf32>
    %30 = arith.mulf %29, %27 : vector<1x128xf32>
    %31 = arith.mulf %21, %9 : vector<1x128xf32>
    %32 = arith.addf %30, %31 : vector<1x128xf32>
    %c0_i32 = arith.constant 0 : i32
    %33 = arith.cmpi sgt, %0, %c0_i32 : i32
    %34 = arith.select %33, %32, %9 : vector<1x128xf32>
    %c0_19 = arith.constant 0 : index
    %c0_20 = arith.constant 0 : index
    %35 = vector.load %arg3[%c0_19, %c0_20] : memref<128x384xf32, #tpu.memory_space<vmem>>, vector<128x384xf32>
    %cst_21 = arith.constant dense<0.000000e+00> : vector<1x384xf32>
    %36 = tpu.matmul %34, %35, %cst_21 {dimension_numbers = #tpu.dot_dimension_numbers<[1], [0], [0], [1], [0, 0, 1, 1], [], []>} : vector<1x128xf32>, vector<128x384xf32>, vector<1x384xf32> -> vector<1x384xf32>
    %c1 = arith.constant 1 : index
    %c0_22 = arith.constant 0 : index
    %37 = vector.load %arg9[%c1, %c0_22] : memref<8x384xf32, #tpu.memory_space<vmem>>, vector<1x256xf32>
    %38 = vector.extract_strided_slice %36 {offsets = [0, 0], sizes = [1, 256], strides = [1, 1]} : vector<1x384xf32> to vector<1x256xf32>
    %39 = arith.addf %37, %38 : vector<1x256xf32>
    %40 = arith.negf %39 : vector<1x256xf32>
    %41 = math.exp %40 : vector<1x256xf32>
    %cst_23 = arith.constant 1.000000e+00 : f32
    %42 = vector.broadcast %cst_23 : f32 to vector<1x256xf32>
    %43 = arith.addf %42, %41 : vector<1x256xf32>
    %44 = arith.divf %42, %43 : vector<1x256xf32>
    %45 = vector.extract_strided_slice %44 {offsets = [0, 0], sizes = [1, 128], strides = [1, 1]} : vector<1x256xf32> to vector<1x128xf32>
    %46 = vector.extract_strided_slice %44 {offsets = [0, 128], sizes = [1, 128], strides = [1, 1]} : vector<1x256xf32> to vector<1x128xf32>
    %c1_24 = arith.constant 1 : index
    %c256_25 = arith.constant 256 : index
    %47 = vector.load %arg9[%c1_24, %c256_25] : memref<8x384xf32, #tpu.memory_space<vmem>>, vector<1x128xf32>
    %48 = vector.extract_strided_slice %36 {offsets = [0, 256], sizes = [1, 128], strides = [1, 1]} : vector<1x384xf32> to vector<1x128xf32>
    %49 = arith.addf %48, %8 : vector<1x128xf32>
    %50 = arith.mulf %45, %49 : vector<1x128xf32>
    %51 = arith.addf %47, %50 : vector<1x128xf32>
    %52 = math.tanh %51 : vector<1x128xf32>
    %cst_26 = arith.constant 1.000000e+00 : f32
    %53 = vector.broadcast %cst_26 : f32 to vector<1x128xf32>
    %54 = arith.subf %53, %46 : vector<1x128xf32>
    %55 = arith.mulf %54, %52 : vector<1x128xf32>
    %56 = arith.mulf %46, %34 : vector<1x128xf32>
    %57 = arith.addf %55, %56 : vector<1x128xf32>
    %c1_i32 = arith.constant 1 : i32
    %58 = arith.cmpi sgt, %0, %c1_i32 : i32
    %59 = arith.select %58, %57, %34 : vector<1x128xf32>
    %c0_27 = arith.constant 0 : index
    %c0_28 = arith.constant 0 : index
    %60 = vector.load %arg3[%c0_27, %c0_28] : memref<128x384xf32, #tpu.memory_space<vmem>>, vector<128x384xf32>
    %cst_29 = arith.constant dense<0.000000e+00> : vector<1x384xf32>
    %61 = tpu.matmul %59, %60, %cst_29 {dimension_numbers = #tpu.dot_dimension_numbers<[1], [0], [0], [1], [0, 0, 1, 1], [], []>} : vector<1x128xf32>, vector<128x384xf32>, vector<1x384xf32> -> vector<1x384xf32>
    %c2 = arith.constant 2 : index
    %c0_30 = arith.constant 0 : index
    %62 = vector.load %arg9[%c2, %c0_30] : memref<8x384xf32, #tpu.memory_space<vmem>>, vector<1x256xf32>
    %63 = vector.extract_strided_slice %61 {offsets = [0, 0], sizes = [1, 256], strides = [1, 1]} : vector<1x384xf32> to vector<1x256xf32>
    %64 = arith.addf %62, %63 : vector<1x256xf32>
    %65 = arith.negf %64 : vector<1x256xf32>
    %66 = math.exp %65 : vector<1x256xf32>
    %cst_31 = arith.constant 1.000000e+00 : f32
    %67 = vector.broadcast %cst_31 : f32 to vector<1x256xf32>
    %68 = arith.addf %67, %66 : vector<1x256xf32>
    %69 = arith.divf %67, %68 : vector<1x256xf32>
    %70 = vector.extract_strided_slice %69 {offsets = [0, 0], sizes = [1, 128], strides = [1, 1]} : vector<1x256xf32> to vector<1x128xf32>
    %71 = vector.extract_strided_slice %69 {offsets = [0, 128], sizes = [1, 128], strides = [1, 1]} : vector<1x256xf32> to vector<1x128xf32>
    %c2_32 = arith.constant 2 : index
    %c256_33 = arith.constant 256 : index
    %72 = vector.load %arg9[%c2_32, %c256_33] : memref<8x384xf32, #tpu.memory_space<vmem>>, vector<1x128xf32>
    %73 = vector.extract_strided_slice %61 {offsets = [0, 256], sizes = [1, 128], strides = [1, 1]} : vector<1x384xf32> to vector<1x128xf32>
    %74 = arith.addf %73, %8 : vector<1x128xf32>
    %75 = arith.mulf %70, %74 : vector<1x128xf32>
    %76 = arith.addf %72, %75 : vector<1x128xf32>
    %77 = math.tanh %76 : vector<1x128xf32>
    %cst_34 = arith.constant 1.000000e+00 : f32
    %78 = vector.broadcast %cst_34 : f32 to vector<1x128xf32>
    %79 = arith.subf %78, %71 : vector<1x128xf32>
    %80 = arith.mulf %79, %77 : vector<1x128xf32>
    %81 = arith.mulf %71, %59 : vector<1x128xf32>
    %82 = arith.addf %80, %81 : vector<1x128xf32>
    %c2_i32 = arith.constant 2 : i32
    %83 = arith.cmpi sgt, %0, %c2_i32 : i32
    %84 = arith.select %83, %82, %59 : vector<1x128xf32>
    %c0_35 = arith.constant 0 : index
    %c0_36 = arith.constant 0 : index
    %85 = vector.load %arg3[%c0_35, %c0_36] : memref<128x384xf32, #tpu.memory_space<vmem>>, vector<128x384xf32>
    %cst_37 = arith.constant dense<0.000000e+00> : vector<1x384xf32>
    %86 = tpu.matmul %84, %85, %cst_37 {dimension_numbers = #tpu.dot_dimension_numbers<[1], [0], [0], [1], [0, 0, 1, 1], [], []>} : vector<1x128xf32>, vector<128x384xf32>, vector<1x384xf32> -> vector<1x384xf32>
    %c3 = arith.constant 3 : index
    %c0_38 = arith.constant 0 : index
    %87 = vector.load %arg9[%c3, %c0_38] : memref<8x384xf32, #tpu.memory_space<vmem>>, vector<1x256xf32>
    %88 = vector.extract_strided_slice %86 {offsets = [0, 0], sizes = [1, 256], strides = [1, 1]} : vector<1x384xf32> to vector<1x256xf32>
    %89 = arith.addf %87, %88 : vector<1x256xf32>
    %90 = arith.negf %89 : vector<1x256xf32>
    %91 = math.exp %90 : vector<1x256xf32>
    %cst_39 = arith.constant 1.000000e+00 : f32
    %92 = vector.broadcast %cst_39 : f32 to vector<1x256xf32>
    %93 = arith.addf %92, %91 : vector<1x256xf32>
    %94 = arith.divf %92, %93 : vector<1x256xf32>
    %95 = vector.extract_strided_slice %94 {offsets = [0, 0], sizes = [1, 128], strides = [1, 1]} : vector<1x256xf32> to vector<1x128xf32>
    %96 = vector.extract_strided_slice %94 {offsets = [0, 128], sizes = [1, 128], strides = [1, 1]} : vector<1x256xf32> to vector<1x128xf32>
    %c3_40 = arith.constant 3 : index
    %c256_41 = arith.constant 256 : index
    %97 = vector.load %arg9[%c3_40, %c256_41] : memref<8x384xf32, #tpu.memory_space<vmem>>, vector<1x128xf32>
    %98 = vector.extract_strided_slice %86 {offsets = [0, 256], sizes = [1, 128], strides = [1, 1]} : vector<1x384xf32> to vector<1x128xf32>
    %99 = arith.addf %98, %8 : vector<1x128xf32>
    %100 = arith.mulf %95, %99 : vector<1x128xf32>
    %101 = arith.addf %97, %100 : vector<1x128xf32>
    %102 = math.tanh %101 : vector<1x128xf32>
    %cst_42 = arith.constant 1.000000e+00 : f32
    %103 = vector.broadcast %cst_42 : f32 to vector<1x128xf32>
    %104 = arith.subf %103, %96 : vector<1x128xf32>
    %105 = arith.mulf %104, %102 : vector<1x128xf32>
    %106 = arith.mulf %96, %84 : vector<1x128xf32>
    %107 = arith.addf %105, %106 : vector<1x128xf32>
    %c3_i32 = arith.constant 3 : i32
    %108 = arith.cmpi sgt, %0, %c3_i32 : i32
    %109 = arith.select %108, %107, %84 : vector<1x128xf32>
    %c0_43 = arith.constant 0 : index
    %c0_44 = arith.constant 0 : index
    %110 = vector.load %arg3[%c0_43, %c0_44] : memref<128x384xf32, #tpu.memory_space<vmem>>, vector<128x384xf32>
    %cst_45 = arith.constant dense<0.000000e+00> : vector<1x384xf32>
    %111 = tpu.matmul %109, %110, %cst_45 {dimension_numbers = #tpu.dot_dimension_numbers<[1], [0], [0], [1], [0, 0, 1, 1], [], []>} : vector<1x128xf32>, vector<128x384xf32>, vector<1x384xf32> -> vector<1x384xf32>
    %c4 = arith.constant 4 : index
    %c0_46 = arith.constant 0 : index
    %112 = vector.load %arg9[%c4, %c0_46] : memref<8x384xf32, #tpu.memory_space<vmem>>, vector<1x256xf32>
    %113 = vector.extract_strided_slice %111 {offsets = [0, 0], sizes = [1, 256], strides = [1, 1]} : vector<1x384xf32> to vector<1x256xf32>
    %114 = arith.addf %112, %113 : vector<1x256xf32>
    %115 = arith.negf %114 : vector<1x256xf32>
    %116 = math.exp %115 : vector<1x256xf32>
    %cst_47 = arith.constant 1.000000e+00 : f32
    %117 = vector.broadcast %cst_47 : f32 to vector<1x256xf32>
    %118 = arith.addf %117, %116 : vector<1x256xf32>
    %119 = arith.divf %117, %118 : vector<1x256xf32>
    %120 = vector.extract_strided_slice %119 {offsets = [0, 0], sizes = [1, 128], strides = [1, 1]} : vector<1x256xf32> to vector<1x128xf32>
    %121 = vector.extract_strided_slice %119 {offsets = [0, 128], sizes = [1, 128], strides = [1, 1]} : vector<1x256xf32> to vector<1x128xf32>
    %c4_48 = arith.constant 4 : index
    %c256_49 = arith.constant 256 : index
    %122 = vector.load %arg9[%c4_48, %c256_49] : memref<8x384xf32, #tpu.memory_space<vmem>>, vector<1x128xf32>
    %123 = vector.extract_strided_slice %111 {offsets = [0, 256], sizes = [1, 128], strides = [1, 1]} : vector<1x384xf32> to vector<1x128xf32>
    %124 = arith.addf %123, %8 : vector<1x128xf32>
    %125 = arith.mulf %120, %124 : vector<1x128xf32>
    %126 = arith.addf %122, %125 : vector<1x128xf32>
    %127 = math.tanh %126 : vector<1x128xf32>
    %cst_50 = arith.constant 1.000000e+00 : f32
    %128 = vector.broadcast %cst_50 : f32 to vector<1x128xf32>
    %129 = arith.subf %128, %121 : vector<1x128xf32>
    %130 = arith.mulf %129, %127 : vector<1x128xf32>
    %131 = arith.mulf %121, %109 : vector<1x128xf32>
    %132 = arith.addf %130, %131 : vector<1x128xf32>
    %c4_i32 = arith.constant 4 : i32
    %133 = arith.cmpi sgt, %0, %c4_i32 : i32
    %134 = arith.select %133, %132, %109 : vector<1x128xf32>
    %c0_51 = arith.constant 0 : index
    %c0_52 = arith.constant 0 : index
    %135 = vector.load %arg3[%c0_51, %c0_52] : memref<128x384xf32, #tpu.memory_space<vmem>>, vector<128x384xf32>
    %cst_53 = arith.constant dense<0.000000e+00> : vector<1x384xf32>
    %136 = tpu.matmul %134, %135, %cst_53 {dimension_numbers = #tpu.dot_dimension_numbers<[1], [0], [0], [1], [0, 0, 1, 1], [], []>} : vector<1x128xf32>, vector<128x384xf32>, vector<1x384xf32> -> vector<1x384xf32>
    %c5 = arith.constant 5 : index
    %c0_54 = arith.constant 0 : index
    %137 = vector.load %arg9[%c5, %c0_54] : memref<8x384xf32, #tpu.memory_space<vmem>>, vector<1x256xf32>
    %138 = vector.extract_strided_slice %136 {offsets = [0, 0], sizes = [1, 256], strides = [1, 1]} : vector<1x384xf32> to vector<1x256xf32>
    %139 = arith.addf %137, %138 : vector<1x256xf32>
    %140 = arith.negf %139 : vector<1x256xf32>
    %141 = math.exp %140 : vector<1x256xf32>
    %cst_55 = arith.constant 1.000000e+00 : f32
    %142 = vector.broadcast %cst_55 : f32 to vector<1x256xf32>
    %143 = arith.addf %142, %141 : vector<1x256xf32>
    %144 = arith.divf %142, %143 : vector<1x256xf32>
    %145 = vector.extract_strided_slice %144 {offsets = [0, 0], sizes = [1, 128], strides = [1, 1]} : vector<1x256xf32> to vector<1x128xf32>
    %146 = vector.extract_strided_slice %144 {offsets = [0, 128], sizes = [1, 128], strides = [1, 1]} : vector<1x256xf32> to vector<1x128xf32>
    %c5_56 = arith.constant 5 : index
    %c256_57 = arith.constant 256 : index
    %147 = vector.load %arg9[%c5_56, %c256_57] : memref<8x384xf32, #tpu.memory_space<vmem>>, vector<1x128xf32>
    %148 = vector.extract_strided_slice %136 {offsets = [0, 256], sizes = [1, 128], strides = [1, 1]} : vector<1x384xf32> to vector<1x128xf32>
    %149 = arith.addf %148, %8 : vector<1x128xf32>
    %150 = arith.mulf %145, %149 : vector<1x128xf32>
    %151 = arith.addf %147, %150 : vector<1x128xf32>
    %152 = math.tanh %151 : vector<1x128xf32>
    %cst_58 = arith.constant 1.000000e+00 : f32
    %153 = vector.broadcast %cst_58 : f32 to vector<1x128xf32>
    %154 = arith.subf %153, %146 : vector<1x128xf32>
    %155 = arith.mulf %154, %152 : vector<1x128xf32>
    %156 = arith.mulf %146, %134 : vector<1x128xf32>
    %157 = arith.addf %155, %156 : vector<1x128xf32>
    %c5_i32 = arith.constant 5 : i32
    %158 = arith.cmpi sgt, %0, %c5_i32 : i32
    %159 = arith.select %158, %157, %134 : vector<1x128xf32>
    %c0_59 = arith.constant 0 : index
    %c0_60 = arith.constant 0 : index
    %160 = vector.load %arg3[%c0_59, %c0_60] : memref<128x384xf32, #tpu.memory_space<vmem>>, vector<128x384xf32>
    %cst_61 = arith.constant dense<0.000000e+00> : vector<1x384xf32>
    %161 = tpu.matmul %159, %160, %cst_61 {dimension_numbers = #tpu.dot_dimension_numbers<[1], [0], [0], [1], [0, 0, 1, 1], [], []>} : vector<1x128xf32>, vector<128x384xf32>, vector<1x384xf32> -> vector<1x384xf32>
    %c6 = arith.constant 6 : index
    %c0_62 = arith.constant 0 : index
    %162 = vector.load %arg9[%c6, %c0_62] : memref<8x384xf32, #tpu.memory_space<vmem>>, vector<1x256xf32>
    %163 = vector.extract_strided_slice %161 {offsets = [0, 0], sizes = [1, 256], strides = [1, 1]} : vector<1x384xf32> to vector<1x256xf32>
    %164 = arith.addf %162, %163 : vector<1x256xf32>
    %165 = arith.negf %164 : vector<1x256xf32>
    %166 = math.exp %165 : vector<1x256xf32>
    %cst_63 = arith.constant 1.000000e+00 : f32
    %167 = vector.broadcast %cst_63 : f32 to vector<1x256xf32>
    %168 = arith.addf %167, %166 : vector<1x256xf32>
    %169 = arith.divf %167, %168 : vector<1x256xf32>
    %170 = vector.extract_strided_slice %169 {offsets = [0, 0], sizes = [1, 128], strides = [1, 1]} : vector<1x256xf32> to vector<1x128xf32>
    %171 = vector.extract_strided_slice %169 {offsets = [0, 128], sizes = [1, 128], strides = [1, 1]} : vector<1x256xf32> to vector<1x128xf32>
    %c6_64 = arith.constant 6 : index
    %c256_65 = arith.constant 256 : index
    %172 = vector.load %arg9[%c6_64, %c256_65] : memref<8x384xf32, #tpu.memory_space<vmem>>, vector<1x128xf32>
    %173 = vector.extract_strided_slice %161 {offsets = [0, 256], sizes = [1, 128], strides = [1, 1]} : vector<1x384xf32> to vector<1x128xf32>
    %174 = arith.addf %173, %8 : vector<1x128xf32>
    %175 = arith.mulf %170, %174 : vector<1x128xf32>
    %176 = arith.addf %172, %175 : vector<1x128xf32>
    %177 = math.tanh %176 : vector<1x128xf32>
    %cst_66 = arith.constant 1.000000e+00 : f32
    %178 = vector.broadcast %cst_66 : f32 to vector<1x128xf32>
    %179 = arith.subf %178, %171 : vector<1x128xf32>
    %180 = arith.mulf %179, %177 : vector<1x128xf32>
    %181 = arith.mulf %171, %159 : vector<1x128xf32>
    %182 = arith.addf %180, %181 : vector<1x128xf32>
    %c6_i32 = arith.constant 6 : i32
    %183 = arith.cmpi sgt, %0, %c6_i32 : i32
    %184 = arith.select %183, %182, %159 : vector<1x128xf32>
    %c0_67 = arith.constant 0 : index
    %c0_68 = arith.constant 0 : index
    %185 = vector.load %arg3[%c0_67, %c0_68] : memref<128x384xf32, #tpu.memory_space<vmem>>, vector<128x384xf32>
    %cst_69 = arith.constant dense<0.000000e+00> : vector<1x384xf32>
    %186 = tpu.matmul %184, %185, %cst_69 {dimension_numbers = #tpu.dot_dimension_numbers<[1], [0], [0], [1], [0, 0, 1, 1], [], []>} : vector<1x128xf32>, vector<128x384xf32>, vector<1x384xf32> -> vector<1x384xf32>
    %c7 = arith.constant 7 : index
    %c0_70 = arith.constant 0 : index
    %187 = vector.load %arg9[%c7, %c0_70] : memref<8x384xf32, #tpu.memory_space<vmem>>, vector<1x256xf32>
    %188 = vector.extract_strided_slice %186 {offsets = [0, 0], sizes = [1, 256], strides = [1, 1]} : vector<1x384xf32> to vector<1x256xf32>
    %189 = arith.addf %187, %188 : vector<1x256xf32>
    %190 = arith.negf %189 : vector<1x256xf32>
    %191 = math.exp %190 : vector<1x256xf32>
    %cst_71 = arith.constant 1.000000e+00 : f32
    %192 = vector.broadcast %cst_71 : f32 to vector<1x256xf32>
    %193 = arith.addf %192, %191 : vector<1x256xf32>
    %194 = arith.divf %192, %193 : vector<1x256xf32>
    %195 = vector.extract_strided_slice %194 {offsets = [0, 0], sizes = [1, 128], strides = [1, 1]} : vector<1x256xf32> to vector<1x128xf32>
    %196 = vector.extract_strided_slice %194 {offsets = [0, 128], sizes = [1, 128], strides = [1, 1]} : vector<1x256xf32> to vector<1x128xf32>
    %c7_72 = arith.constant 7 : index
    %c256_73 = arith.constant 256 : index
    %197 = vector.load %arg9[%c7_72, %c256_73] : memref<8x384xf32, #tpu.memory_space<vmem>>, vector<1x128xf32>
    %198 = vector.extract_strided_slice %186 {offsets = [0, 256], sizes = [1, 128], strides = [1, 1]} : vector<1x384xf32> to vector<1x128xf32>
    %199 = arith.addf %198, %8 : vector<1x128xf32>
    %200 = arith.mulf %195, %199 : vector<1x128xf32>
    %201 = arith.addf %197, %200 : vector<1x128xf32>
    %202 = math.tanh %201 : vector<1x128xf32>
    %cst_74 = arith.constant 1.000000e+00 : f32
    %203 = vector.broadcast %cst_74 : f32 to vector<1x128xf32>
    %204 = arith.subf %203, %196 : vector<1x128xf32>
    %205 = arith.mulf %204, %202 : vector<1x128xf32>
    %206 = arith.mulf %196, %184 : vector<1x128xf32>
    %207 = arith.addf %205, %206 : vector<1x128xf32>
    %c7_i32 = arith.constant 7 : i32
    %208 = arith.cmpi sgt, %0, %c7_i32 : i32
    %209 = arith.select %208, %207, %184 : vector<1x128xf32>
    %c0_75 = arith.constant 0 : index
    %c0_76 = arith.constant 0 : index
    %210 = vector.load %arg6[%c0_75, %c0_76] : memref<1x128xf32, #tpu.memory_space<vmem>>, vector<1x128xf32>
    %211 = arith.mulf %209, %210 : vector<1x128xf32>
    %cst_77 = arith.constant dense<0.000000e+00> : vector<1xf32>
    %212 = vector.multi_reduction <add>, %211, %cst_77 [1] : vector<1x128xf32> to vector<1xf32>
    %213 = vector.shape_cast %212 : vector<1xf32> to vector<1x1xf32>
    %c0_78 = arith.constant 0 : index
    %c0_79 = arith.constant 0 : index
    %214 = vector.load %arg7[%c0_78, %c0_79] : memref<1x1xf32, #tpu.memory_space<vmem>>, vector<1x1xf32>
    %215 = arith.addf %213, %214 : vector<1x1xf32>
    %c0_80 = arith.constant 0 : index
    %c0_81 = arith.constant 0 : index
    %216 = vector.load %arg8[%c0_80, %c0_81] : memref<1x1xf32, #tpu.memory_space<vmem>>, vector<1x1xf32>
    tpu.vector_store %arg8[%c0_80, %c0_81], %215 {strides = array<i32>} : memref<1x1xf32, #tpu.memory_space<vmem>>, vector<1x1xf32>,
    return
  }
}

</mosaic_0001>

<llo_original>
// kernel: _run_gru_value.1
$region0: #{_run_gru_value.1}
  #allocation0 [shape = 'u32[]', space=smem, size = 0x4, offset = 0x4, fixed_abs, tag = 'smem constant byte address 0x4 - core index']
  #allocation1 [shape = 'u32[144,128]{1,0:T(1,128)}', space=vmem, size = 0x12000, scoped, tag = 'internal scratch']
  #allocation2 [shape = 'f32[8,384]{1,0:T(8,128)}', space=vmem, size = 0x3000, scoped, tag = 'scratch operand']
  #allocation3 [shape = 's32[1]{0:T(128)S(6)}', space=smem, size = 0x200, scoped, tag = 'scoped memory for _run_gru_value.1']
  #allocation4 [shape = 'f32[1,1]{1,0:T(1,128)S(1)}', space=vmem, size = 0x200, scoped, tag = 'scoped memory for _run_gru_value.1']
  %s0 = inlined_call_operand.<no memory space> [shape: s32[1], index: 0, kind: input, shape index: {}]
  %s1 = inlined_call_operand.hbm [shape: f32[8,32], index: 1, kind: input, shape index: {}]
  %s2 = inlined_call_operand.hbm [shape: f32[32,384], index: 2, kind: input, shape index: {}]
  %s3 = inlined_call_operand.hbm [shape: f32[128,384], index: 3, kind: input, shape index: {}]
  %s4 = inlined_call_operand.vmem [shape: f32[1,384], index: 4, kind: input, shape index: {}]
  %s5 = inlined_call_operand.vmem [shape: f32[1,128], index: 5, kind: input, shape index: {}]
  %s6 = inlined_call_operand.vmem [shape: f32[1,128], index: 6, kind: input, shape index: {}]
  %s7 = inlined_call_operand.<no memory space> [shape: f32[1,1], index: 7, kind: input, shape index: {}]
  %s8 = inlined_call_operand.hbm [shape: f32[1,1], index: 8, kind: output, shape index: {}]
  %s9 = sld [smem:[#allocation0]]
  $region54: #{_run_gru_value.1} parent=0
    _
  %s11 = ssub.s32 1, %s9
  %s12 = scalar_select 0, %s11, %s9
  %13 = sst [smem:[#allocation3]] %s0
  %v14 = vstv %s7
  %15 = vst [vmem:[#allocation4] sm:$0x1] %v14
  $region1: #{_run_gru_value.1} parent=0
    #allocation5 [shape = 'u8[4096]{0}', space=vmem, size = 0x1000, scoped, tag = 'input window, operand 1, single buffered']
    #allocation6 [shape = 's32[1]{0}', space=sflag, size = 0x4, scoped, tag = 'scoped memory for _run_gru_value.1']
    #allocation7 [shape = 's32[1]{0}', space=sflag, size = 0x4, scoped, tag = 'scoped memory for _run_gru_value.1']
    #allocation8 [shape = 'u8[49152]{0}', space=vmem, size = 0xc000, scoped, tag = 'input window, operand 2, single buffered']
    #allocation9 [shape = 's32[1]{0}', space=sflag, size = 0x4, scoped, tag = 'scoped memory for _run_gru_value.1']
    #allocation10 [shape = 'u8[196608]{0}', space=vmem, size = 0x30000, scoped, tag = 'input window, operand 3, single buffered']
    #allocation11 [shape = 'u8[512]{0}', space=vmem, size = 0x400, scoped, tag = 'output window, operand 0, single buffered']
    %16 = vsyncpa [#allocation6], 0
    %17 = vsyncpa [#allocation9], 0
    %18 = vsyncpa [#allocation7], 0
    // Predicated region
    $region2: #{_run_gru_value.1} parent=1 // pred_check
      _
    $region3: #{_run_gru_value.1} parent=1 // pred_check_branch
      %20 = sbr.rel (0) target = $region5
    $region4: #{_run_gru_value.1} parent=1 // pred_region
      _
    $region5: #{_run_gru_value.1} parent=1 // pred_fallthru
      _
    // Predicated region
    $region6: #{_run_gru_value.1} parent=1 // pred_check
      _
    $region7: #{_run_gru_value.1} parent=1 // pred_check_branch
      %22 = sbr.rel (0) target = $region9
    $region8: #{_run_gru_value.1} parent=1 // pred_region
      %s24 = ssub.s32 128, 128
      %25 = vsyncadd [#allocation6], %s24
      %s27 = sshll.u32 [#allocation5], 4
      %s28 = int_to_ptr.vmem [resolvable:$true] %s27
      %30 = dma.hbm_to_vmem [thread:$0]  %s1, 128, %s28, [#allocation6]
    $region9: #{_run_gru_value.1} parent=1 // pred_fallthru
      _
    // Predicated region
    $region10: #{_run_gru_value.1} parent=1 // pred_check
      _
    $region11: #{_run_gru_value.1} parent=1 // pred_check_branch
      %32 = sbr.rel (0) target = $region13
    $region12: #{_run_gru_value.1} parent=1 // pred_region
      %s34 = ssub.s32 1536, 1536
      %35 = vsyncadd [#allocation9], %s34
      %s36 = sshll.u32 [#allocation8], 4
      %s37 = int_to_ptr.vmem [resolvable:$true] %s36
      %42 = dma.hbm_to_vmem [thread:$0]  %s2, 1536, %s37, [#allocation9], 384, 384, 24
    $region13: #{_run_gru_value.1} parent=1 // pred_fallthru
      _
    // Predicated region
    $region14: #{_run_gru_value.1} parent=1 // pred_check
      _
    $region15: #{_run_gru_value.1} parent=1 // pred_check_branch
      %44 = sbr.rel (0) target = $region17
    $region16: #{_run_gru_value.1} parent=1 // pred_region
      %s46 = ssub.s32 6144, 6144
      %47 = vsyncadd [#allocation9], %s46
      %s48 = sshll.u32 [#allocation10], 4
      %s49 = int_to_ptr.vmem [resolvable:$true] %s48
      %54 = dma.hbm_to_vmem [thread:$0]  %s3, 6144, %s49, [#allocation9], 384, 384, 24
    $region17: #{_run_gru_value.1} parent=1 // pred_fallthru
      _
    // Predicated region
    $region18: #{_run_gru_value.1} parent=1 // pred_check
      _
    $region19: #{_run_gru_value.1} parent=1 // pred_check_branch
      %56 = sbr.rel (0) target = $region21
    $region20: #{_run_gru_value.1} parent=1 // pred_region
      _
    $region21: #{_run_gru_value.1} parent=1 // pred_fallthru
      _
    // Predicated region
    $region22: #{_run_gru_value.1} parent=1 // pred_check
      _
    $region23: #{_run_gru_value.1} parent=1 // pred_check_branch
      %58 = sbr.rel (0) target = $region25
    $region24: #{_run_gru_value.1} parent=1 // pred_region
      _
    $region25: #{_run_gru_value.1} parent=1 // pred_fallthru
      _
    // Predicated region
    $region26: #{_run_gru_value.1} parent=1 // pred_check
      _
    $region27: #{_run_gru_value.1} parent=1 // pred_check_branch
      %60 = sbr.rel (0) target = $region29
    $region28: #{_run_gru_value.1} parent=1 // pred_region
      _
    $region29: #{_run_gru_value.1} parent=1 // pred_fallthru
      _
    // Predicated region
    $region30: #{_run_gru_value.1} parent=1 // pred_check
      _
    $region31: #{_run_gru_value.1} parent=1 // pred_check_branch
      %62 = sbr.rel (0) target = $region33
    $region32: #{_run_gru_value.1} parent=1 // pred_region
      _
    $region33: #{_run_gru_value.1} parent=1 // pred_fallthru
      _
    // Predicated region
    $region34: #{_run_gru_value.1} parent=1 // pred_check
      _
    $region35: #{_run_gru_value.1} parent=1 // pred_check_branch
      %64 = sbr.rel (0) target = $region37
    $region36: #{_run_gru_value.1} parent=1 // pred_region
      %65 = dma.done [#allocation6], 128
    $region37: #{_run_gru_value.1} parent=1 // pred_fallthru
      _
    // Predicated region
    $region38: #{_run_gru_value.1} parent=1 // pred_check
      _
    $region39: #{_run_gru_value.1} parent=1 // pred_check_branch
      %67 = sbr.rel (0) target = $region41
    $region40: #{_run_gru_value.1} parent=1 // pred_region
      %68 = dma.done [#allocation9], 1536
    $region41: #{_run_gru_value.1} parent=1 // pred_fallthru
      _
    // Predicated region
    $region42: #{_run_gru_value.1} parent=1 // pred_check
      _
    $region43: #{_run_gru_value.1} parent=1 // pred_check_branch
      %70 = sbr.rel (0) target = $region45
    $region44: #{_run_gru_value.1} parent=1 // pred_region
      %71 = dma.done [#allocation9], 6144
    $region45: #{_run_gru_value.1} parent=1 // pred_fallthru
      _
    %s72 = sld [smem:[#allocation3]]
    %v73 = vld [vmem:[#allocation5] sm:$0xff]
    %v74 = vld [vmem:[#allocation8] sm:$0xff]
    %v75 = vld [vmem:[#allocation8 + $0x8] sm:$0xff]
    %v76 = vld [vmem:[#allocation8 + $0x10] sm:$0xff]
    %v77 = vld [vmem:[#allocation8 + $0x18] sm:$0xff]
    %v78 = vld [vmem:[#allocation8 + $0x20] sm:$0xff]
    %v79 = vld [vmem:[#allocation8 + $0x28] sm:$0xff]
    %v80 = vld [vmem:[#allocation8 + $0x30] sm:$0xff]
    %v81 = vld [vmem:[#allocation8 + $0x38] sm:$0xff]
    %v82 = vld [vmem:[#allocation8 + $0x40] sm:$0xff]
    %v83 = vld [vmem:[#allocation8 + $0x48] sm:$0xff]
    %v84 = vld [vmem:[#allocation8 + $0x50] sm:$0xff]
    %v85 = vld [vmem:[#allocation8 + $0x58] sm:$0xff]
    %v86 = vld [vmem:[%s4] sm:$0x7]
    %v88 = vlaneseq
    %v89 = vshrl.u32 %v88, 7
    %v90 = vsub.s32 0, %v89
    %v91 = vrot.slane %v86, %v90
    %v92 = vlaneseq
    %v93 = vshrl.u32 %v92, 7
    %v94 = vsub.s32 1, %v93
    %v95 = vrot.slane %v86, %v94
    %v96 = vlaneseq
    %v97 = vshrl.u32 %v96, 7
    %v98 = vsub.s32 2, %v97
    %v99 = vrot.slane %v86, %v98
    %vm103 = vcmask 261120
    %v105 = vsel %vm103, %v73, 0
    %107 = vmatprep.subr.mxu0 %v75
    %108 = vmatpush1.msra.mxu0 %v74
    %109 = vmatprep.subr.mxu0 %v78
    %110 = vmatpush1.msra.mxu0 %v77
    %111 = vmatprep.subr.mxu0 %v81
    %112 = vmatpush1.msra.mxu0 %v80
    %113 = vmatprep.subr.mxu0 %v84
    %114 = vmatpush1.msra.mxu0 %v83
    %115 = vmatprep.subr.mxu0 0.0
    %116 = vmatpush1.msra.mxu0 0.0
    %117 = vmatprep.subr.mxu0 0.0
    %118 = vmatpush1.msra.mxu0 0.0
    %119 = vmatprep.subr.mxu0 0.0
    %120 = vmatpush1.msra.mxu0 0.0
    %121 = vmatprep.subr.mxu0 0.0
    %122 = vmatpush1.msra.mxu0 0.0
    %123 = vmatprep.subr.mxu0 0.0
    %124 = vmatpush1.msra.mxu0 0.0
    %125 = vmatprep.subr.mxu0 0.0
    %126 = vmatpush1.msra.mxu0 0.0
    %127 = vmatprep.subr.mxu0 0.0
    %128 = vmatpush1.msra.mxu0 0.0
    %129 = vmatprep.subr.mxu0 0.0
    %130 = vmatpush1.msra.mxu0 0.0
    %131 = vmatprep.subr.mxu0 0.0
    %132 = vmatpush1.msra.mxu0 0.0
    %133 = vmatprep.subr.mxu0 0.0
    %134 = vmatpush1.msra.mxu0 0.0
    %135 = vmatprep.subr.mxu0 0.0
    %136 = vmatpush1.msra.mxu0 0.0
    %137 = vmatprep.subr.mxu0 0.0
    %138 = vmatpush1.msra.mxu0 0.0
    %139 = vmatprep.subr.mxu0 0.0
    %140 = vmatpush1.msra.mxu0 0.0
    %141 = vmatprep.subr.mxu0 0.0
    %142 = vmatpush1.msra.mxu0 0.0
    %143 = vmatprep.subr.mxu0 0.0
    %144 = vmatpush1.msra.mxu0 0.0
    %145 = vmatprep.subr.mxu0 0.0
    %146 = vmatpush1.msra.mxu0 0.0
    %147 = vmatprep.subr.mxu0 0.0
    %148 = vmatpush1.msra.mxu0 0.0
    %149 = vmatprep.subr.mxu0 0.0
    %150 = vmatpush1.msra.mxu0 0.0
    %151 = vmatprep.subr.mxu0 0.0
    %152 = vmatpush1.msra.mxu0 0.0
    %153 = vmatprep.subr.mxu0 0.0
    %154 = vmatpush1.msra.mxu0 0.0
    %155 = vmatprep.subr.mxu0 0.0
    %156 = vmatpush1.msra.mxu0 0.0
    %157 = vmatprep.subr.mxu0 0.0
    %158 = vmatpush1.msra.mxu0 0.0
    %159 = vmatprep.subr.mxu0 0.0
    %160 = vmatpush1.msra.mxu0 0.0
    %161 = vmatprep.subr.mxu0 0.0
    %162 = vmatpush1.msra.mxu0 0.0
    %163 = vmatprep.subr.mxu0 0.0
    %164 = vmatpush1.msra.mxu0 0.0
    %165 = vmatprep.subr.mxu0 0.0
    %166 = vmatpush1.msra.mxu0 0.0
    %167 = vmatprep.subr.mxu0 0.0
    %168 = vmatpush1.msra.mxu0 0.0
    %169 = vmatprep.subr.mxu0 0.0
    %170 = vmatpush1.msra.mxu0 0.0
    %171 = vmatprep.mubr.f32.mxu0 0.0
    %172 = vmatmul.mubr.f32.gmra.mrb[0].mxu0 %v105
    %v173 = vpop.f32.mrb[0].mxu0
    %v174 = vadd.f32 %v91, %v173
    %v175 = vpop.f32.mrb[0].mxu0
    %v176 = vadd.f32 %v95, %v175
    %177 = vdwg.mxu0
    %178 = vmatprep.subr.mxu0 0.0
    %179 = vmatpush1.msra.mxu0 %v76
    %180 = vmatprep.subr.mxu0 0.0
    %181 = vmatpush1.msra.mxu0 %v79
    %182 = vmatprep.subr.mxu0 0.0
    %183 = vmatpush1.msra.mxu0 %v82
    %184 = vmatprep.subr.mxu0 0.0
    %185 = vmatpush1.msra.mxu0 %v85
    %186 = vmatprep.subr.mxu0 0.0
    %187 = vmatpush1.msra.mxu0 0.0
    %188 = vmatprep.subr.mxu0 0.0
    %189 = vmatpush1.msra.mxu0 0.0
    %190 = vmatprep.subr.mxu0 0.0
    %191 = vmatpush1.msra.mxu0 0.0
    %192 = vmatprep.subr.mxu0 0.0
    %193 = vmatpush1.msra.mxu0 0.0
    %194 = vmatprep.subr.mxu0 0.0
    %195 = vmatpush1.msra.mxu0 0.0
    %196 = vmatprep.subr.mxu0 0.0
    %197 = vmatpush1.msra.mxu0 0.0
    %198 = vmatprep.subr.mxu0 0.0
    %199 = vmatpush1.msra.mxu0 0.0
    %200 = vmatprep.subr.mxu0 0.0
    %201 = vmatpush1.msra.mxu0 0.0
    %202 = vmatprep.subr.mxu0 0.0
    %203 = vmatpush1.msra.mxu0 0.0
    %204 = vmatprep.subr.mxu0 0.0
    %205 = vmatpush1.msra.mxu0 0.0
    %206 = vmatprep.subr.mxu0 0.0
    %207 = vmatpush1.msra.mxu0 0.0
    %208 = vmatprep.subr.mxu0 0.0
    %209 = vmatpush1.msra.mxu0 0.0
    %210 = vmatprep.subr.mxu0 0.0
    %211 = vmatpush1.msra.mxu0 0.0
    %212 = vmatprep.subr.mxu0 0.0
    %213 = vmatpush1.msra.mxu0 0.0
    %214 = vmatprep.subr.mxu0 0.0
    %215 = vmatpush1.msra.mxu0 0.0
    %216 = vmatprep.subr.mxu0 0.0
    %217 = vmatpush1.msra.mxu0 0.0
    %218 = vmatprep.subr.mxu0 0.0
    %219 = vmatpush1.msra.mxu0 0.0
    %220 = vmatprep.subr.mxu0 0.0
    %221 = vmatpush1.msra.mxu0 0.0
    %222 = vmatprep.subr.mxu0 0.0
    %223 = vmatpush1.msra.mxu0 0.0
    %224 = vmatprep.subr.mxu0 0.0
    %225 = vmatpush1.msra.mxu0 0.0
    %226 = vmatprep.subr.mxu0 0.0
    %227 = vmatpush1.msra.mxu0 0.0
    %228 = vmatprep.subr.mxu0 0.0
    %229 = vmatpush1.msra.mxu0 0.0
    %230 = vmatprep.subr.mxu0 0.0
    %231 = vmatpush1.msra.mxu0 0.0
    %232 = vmatprep.subr.mxu0 0.0
    %233 = vmatpush1.msra.mxu0 0.0
    %234 = vmatprep.subr.mxu0 0.0
    %235 = vmatpush1.msra.mxu0 0.0
    %236 = vmatprep.subr.mxu0 0.0
    %237 = vmatpush1.msra.mxu0 0.0
    %238 = vmatprep.subr.mxu0 0.0
    %239 = vmatpush1.msra.mxu0 0.0
    %240 = vmatprep.subr.mxu0 0.0
    %241 = vmatpush1.msra.mxu0 0.0
    %242 = vmatprep.mubr.f32.mxu0 0.0
    %243 = vmatmul.mubr.f32.gmra.mrb[0].mxu0 %v105
    %v244 = vpop.f32.mrb[0].mxu0
    %v245 = vadd.f32 %v99, %v244
    %v246 = vpop.f32.mrb[0].mxu0
    %247 = vdwg.mxu0
    %248 = vst [vmem:[#allocation2] sm:$0xff] %v174
    %249 = vst [vmem:[#allocation2 + $0x8] sm:$0xff] %v176
    %250 = vst [vmem:[#allocation2 + $0x10] sm:$0xff] %v245
    %v251 = vld [vmem:[%s5] sm:$0x1]
    %v252 = vld [vmem:[#allocation10] sm:$0xff]
    %v253 = vld [vmem:[#allocation10 + $0x8] sm:$0xff]
    %v254 = vld [vmem:[#allocation10 + $0x10] sm:$0xff]
    %v255 = vld [vmem:[#allocation10 + $0x18] sm:$0xff]
    %v256 = vld [vmem:[#allocation10 + $0x20] sm:$0xff]
    %v257 = vld [vmem:[#allocation10 + $0x28] sm:$0xff]
    %v258 = vld [vmem:[#allocation10 + $0x30] sm:$0xff]
    %v259 = vld [vmem:[#allocation10 + $0x38] sm:$0xff]
    %v260 = vld [vmem:[#allocation10 + $0x40] sm:$0xff]
    %v261 = vld [vmem:[#allocation10 + $0x48] sm:$0xff]
    %v262 = vld [vmem:[#allocation10 + $0x50] sm:$0xff]
    %v263 = vld [vmem:[#allocation10 + $0x58] sm:$0xff]
    %v264 = vld [vmem:[#allocation10 + $0x60] sm:$0xff]
    %v265 = vld [vmem:[#allocation10 + $0x68] sm:$0xff]
    %v266 = vld [vmem:[#allocation10 + $0x70] sm:$0xff]
    %v267 = vld [vmem:[#allocation10 + $0x78] sm:$0xff]
    %v268 = vld [vmem:[#allocation10 + $0x80] sm:$0xff]
    %v269 = vld [vmem:[#allocation10 + $0x88] sm:$0xff]
    %v270 = vld [vmem:[#allocation10 + $0x90] sm:$0xff]
    %v271 = vld [vmem:[#allocation10 + $0x98] sm:$0xff]
    %v272 = vld [vmem:[#allocation10 + $0xa0] sm:$0xff]
    %v273 = vld [vmem:[#allocation10 + $0xa8] sm:$0xff]
    %v274 = vld [vmem:[#allocation10 + $0xb0] sm:$0xff]
    %v275 = vld [vmem:[#allocation10 + $0xb8] sm:$0xff]
    %v276 = vld [vmem:[#allocation10 + $0xc0] sm:$0xff]
    %v277 = vld [vmem:[#allocation10 + $0xc8] sm:$0xff]
    %v278 = vld [vmem:[#allocation10 + $0xd0] sm:$0xff]
    %v279 = vld [vmem:[#allocation10 + $0xd8] sm:$0xff]
    %v280 = vld [vmem:[#allocation10 + $0xe0] sm:$0xff]
    %v281 = vld [vmem:[#allocation10 + $0xe8] sm:$0xff]
    %v282 = vld [vmem:[#allocation10 + $0xf0] sm:$0xff]
    %v283 = vld [vmem:[#allocation10 + $0xf8] sm:$0xff]
    %v284 = vld [vmem:[#allocation10 + $0x100] sm:$0xff]
    %v285 = vld [vmem:[#allocation10 + $0x108] sm:$0xff]
    %v286 = vld [vmem:[#allocation10 + $0x110] sm:$0xff]
    %v287 = vld [vmem:[#allocation10 + $0x118] sm:$0xff]
    %v288 = vld [vmem:[#allocation10 + $0x120] sm:$0xff]
    %v289 = vld [vmem:[#allocation10 + $0x128] sm:$0xff]
    %v290 = vld [vmem:[#allocation10 + $0x130] sm:$0xff]
    %v291 = vld [vmem:[#allocation10 + $0x138] sm:$0xff]
    %v292 = vld [vmem:[#allocation10 + $0x140] sm:$0xff]
    %v293 = vld [vmem:[#allocation10 + $0x148] sm:$0xff]
    %v294 = vld [vmem:[#allocation10 + $0x150] sm:$0xff]
    %v295 = vld [vmem:[#allocation10 + $0x158] sm:$0xff]
    %v296 = vld [vmem:[#allocation10 + $0x160] sm:$0xff]
    %v297 = vld [vmem:[#allocation10 + $0x168] sm:$0xff]
    %v298 = vld [vmem:[#allocation10 + $0x170] sm:$0xff]
    %v299 = vld [vmem:[#allocation10 + $0x178] sm:$0xff]
    %300 = vmatprep.subr.mxu0 %v253
    %301 = vmatpush1.msra.mxu0 %v252
    %302 = vmatprep.subr.mxu0 %v256
    %303 = vmatpush1.msra.mxu0 %v255
    %304 = vmatprep.subr.mxu0 %v259
    %305 = vmatpush1.msra.mxu0 %v258
    %306 = vmatprep.subr.mxu0 %v262
    %307 = vmatpush1.msra.mxu0 %v261
    %308 = vmatprep.subr.mxu0 %v265
    %309 = vmatpush1.msra.mxu0 %v264
    %310 = vmatprep.subr.mxu0 %v268
    %311 = vmatpush1.msra.mxu0 %v267
    %312 = vmatprep.subr.mxu0 %v271
    %313 = vmatpush1.msra.mxu0 %v270
    %314 = vmatprep.subr.mxu0 %v274
    %315 = vmatpush1.msra.mxu0 %v273
    %316 = vmatprep.subr.mxu0 %v277
    %317 = vmatpush1.msra.mxu0 %v276
    %318 = vmatprep.subr.mxu0 %v280
    %319 = vmatpush1.msra.mxu0 %v279
    %320 = vmatprep.subr.mxu0 %v283
    %321 = vmatpush1.msra.mxu0 %v282
    %322 = vmatprep.subr.mxu0 %v286
    %323 = vmatpush1.msra.mxu0 %v285
    %324 = vmatprep.subr.mxu0 %v289
    %325 = vmatpush1.msra.mxu0 %v288
    %326 = vmatprep.subr.mxu0 %v292
    %327 = vmatpush1.msra.mxu0 %v291
    %328 = vmatprep.subr.mxu0 %v295
    %329 = vmatpush1.msra.mxu0 %v294
    %330 = vmatprep.subr.mxu0 %v298
    %331 = vmatpush1.msra.mxu0 %v297
    %332 = vmatprep.subr.mxu0 0.0
    %333 = vmatpush1.msra.mxu0 0.0
    %334 = vmatprep.subr.mxu0 0.0
    %335 = vmatpush1.msra.mxu0 0.0
    %336 = vmatprep.subr.mxu0 0.0
    %337 = vmatpush1.msra.mxu0 0.0
    %338 = vmatprep.subr.mxu0 0.0
    %339 = vmatpush1.msra.mxu0 0.0
    %340 = vmatprep.subr.mxu0 0.0
    %341 = vmatpush1.msra.mxu0 0.0
    %342 = vmatprep.subr.mxu0 0.0
    %343 = vmatpush1.msra.mxu0 0.0
    %344 = vmatprep.subr.mxu0 0.0
    %345 = vmatpush1.msra.mxu0 0.0
    %346 = vmatprep.subr.mxu0 0.0
    %347 = vmatpush1.msra.mxu0 0.0
    %348 = vmatprep.subr.mxu0 0.0
    %349 = vmatpush1.msra.mxu0 0.0
    %350 = vmatprep.subr.mxu0 0.0
    %351 = vmatpush1.msra.mxu0 0.0
    %352 = vmatprep.subr.mxu0 0.0
    %353 = vmatpush1.msra.mxu0 0.0
    %354 = vmatprep.subr.mxu0 0.0
    %355 = vmatpush1.msra.mxu0 0.0
    %356 = vmatprep.subr.mxu0 0.0
    %357 = vmatpush1.msra.mxu0 0.0
    %358 = vmatprep.subr.mxu0 0.0
    %359 = vmatpush1.msra.mxu0 0.0
    %360 = vmatprep.subr.mxu0 0.0
    %361 = vmatpush1.msra.mxu0 0.0
    %362 = vmatprep.subr.mxu0 0.0
    %363 = vmatpush1.msra.mxu0 0.0
    %364 = vmatprep.mubr.f32.mxu0 0.0
    %365 = vmatmul.mubr.f32.gmra.mrb[0].mxu0 0.0
    %v366 = vpop.f32.mrb[0].mxu0
    %v367 = vadd.f32 0.0, %v366
    %v368 = vpop.f32.mrb[0].mxu0
    %v369 = vadd.f32 0.0, %v368
    %370 = vdwg.mxu0
    %371 = vmatprep.subr.mxu0 0.0
    %372 = vmatpush1.msra.mxu0 %v254
    %373 = vmatprep.subr.mxu0 0.0
    %374 = vmatpush1.msra.mxu0 %v257
    %375 = vmatprep.subr.mxu0 0.0
    %376 = vmatpush1.msra.mxu0 %v260
    %377 = vmatprep.subr.mxu0 0.0
    %378 = vmatpush1.msra.mxu0 %v263
    %379 = vmatprep.subr.mxu0 0.0
    %380 = vmatpush1.msra.mxu0 %v266
    %381 = vmatprep.subr.mxu0 0.0
    %382 = vmatpush1.msra.mxu0 %v269
    %383 = vmatprep.subr.mxu0 0.0
    %384 = vmatpush1.msra.mxu0 %v272
    %385 = vmatprep.subr.mxu0 0.0
    %386 = vmatpush1.msra.mxu0 %v275
    %387 = vmatprep.subr.mxu0 0.0
    %388 = vmatpush1.msra.mxu0 %v278
    %389 = vmatprep.subr.mxu0 0.0
    %390 = vmatpush1.msra.mxu0 %v281
    %391 = vmatprep.subr.mxu0 0.0
    %392 = vmatpush1.msra.mxu0 %v284
    %393 = vmatprep.subr.mxu0 0.0
    %394 = vmatpush1.msra.mxu0 %v287
    %395 = vmatprep.subr.mxu0 0.0
    %396 = vmatpush1.msra.mxu0 %v290
    %397 = vmatprep.subr.mxu0 0.0
    %398 = vmatpush1.msra.mxu0 %v293
    %399 = vmatprep.subr.mxu0 0.0
    %400 = vmatpush1.msra.mxu0 %v296
    %401 = vmatprep.subr.mxu0 0.0
    %402 = vmatpush1.msra.mxu0 %v299
    %403 = vmatprep.subr.mxu0 0.0
    %404 = vmatpush1.msra.mxu0 0.0
    %405 = vmatprep.subr.mxu0 0.0
    %406 = vmatpush1.msra.mxu0 0.0
    %407 = vmatprep.subr.mxu0 0.0
    %408 = vmatpush1.msra.mxu0 0.0
    %409 = vmatprep.subr.mxu0 0.0
    %410 = vmatpush1.msra.mxu0 0.0
    %411 = vmatprep.subr.mxu0 0.0
    %412 = vmatpush1.msra.mxu0 0.0
    %413 = vmatprep.subr.mxu0 0.0
    %414 = vmatpush1.msra.mxu0 0.0
    %415 = vmatprep.subr.mxu0 0.0
    %416 = vmatpush1.msra.mxu0 0.0
    %417 = vmatprep.subr.mxu0 0.0
    %418 = vmatpush1.msra.mxu0 0.0
    %419 = vmatprep.subr.mxu0 0.0
    %420 = vmatpush1.msra.mxu0 0.0
    %421 = vmatprep.subr.mxu0 0.0
    %422 = vmatpush1.msra.mxu0 0.0
    %423 = vmatprep.subr.mxu0 0.0
    %424 = vmatpush1.msra.mxu0 0.0
    %425 = vmatprep.subr.mxu0 0.0
    %426 = vmatpush1.msra.mxu0 0.0
    %427 = vmatprep.subr.mxu0 0.0
    %428 = vmatpush1.msra.mxu0 0.0
    %429 = vmatprep.subr.mxu0 0.0
    %430 = vmatpush1.msra.mxu0 0.0
    %431 = vmatprep.subr.mxu0 0.0
    %432 = vmatpush1.msra.mxu0 0.0
    %433 = vmatprep.subr.mxu0 0.0
    %434 = vmatpush1.msra.mxu0 0.0
    %435 = vmatprep.mubr.f32.mxu0 0.0
    %436 = vmatmul.mubr.f32.gmra.mrb[0].mxu0 0.0
    %v437 = vpop.f32.mrb[0].mxu0
    %v438 = vadd.f32 0.0, %v437
    %v439 = vpop.f32.mrb[0].mxu0
    %440 = vdwg.mxu0
    %v441 = vld [vmem:[#allocation2] ss:$8 sm:$0x3]
    %v444 = vcombine.low %v367, %v369
    %v446 = vunpack.c.l.s4 1966171168
    %v447 = vunpack.c.0.s8 %v446
    %v448 = vlaneseq
    %v449 = vshrl.u32 %v448, 7
    %v450 = vsub.s32 %v447, %v449
    %v451 = vrot.slane %v444, %v450
    %v453 = vunpack.c.l.s4 1966171168
    %v454 = vunpack.c.0.s8 %v453
    %v455 = vlaneseq
    %v456 = vshrl.u32 %v455, 7
    %v457 = vsub.s32 %v454, %v456
    %v458 = vrot.slane %v451, %v457
    %v460 = vadd.f32 %v441, %v458
    %v461 = vxor.u32 %v460, 2147483648
    %v462 = vmul.f32 %v461, 1.442695
    %v463 = vpow.pop %v462
    %v464 = vadd.f32 %v463, 1.0
    %v465 = vrcp.pop %v464
    %v466 = vmul.f32 1.0, %v465
    %v467 = vld [vmem:[#allocation2 + $0x10] ss:$0 sm:$0xff]
    %v468 = vadd.f32 %v438, %v251
    %v469 = vmul.f32 %v466, %v468
    %v470 = vadd.f32 %v467, %v469
    %v471 = vtanh.pop %v470
    %v473 = vrot.slane %v466, 1
    %v475 = vsub.f32 1.0, %v473
    %v476 = vmul.f32 %v475, %v471
    %v477 = vmul.f32 %v473, 0.0
    %v478 = vadd.f32 %v476, %v477
    %p479 = scmp.gt.s32.totalorder %s72, 0
    %s480 = scalar_select %p479, 1, 0
    %v481 = vstv %s480
    %vm482 = vcmp.eq.s32.totalorder %v481, 1
    %v483 = vsel %vm482, %v478, 0.0
    %484 = vmatprep.subr.mxu0 %v253
    %485 = vmatpush1.msra.mxu0 %v252
    %486 = vmatprep.subr.mxu0 %v256
    %487 = vmatpush1.msra.mxu0 %v255
    %488 = vmatprep.subr.mxu0 %v259
    %489 = vmatpush1.msra.mxu0 %v258
    %490 = vmatprep.subr.mxu0 %v262
    %491 = vmatpush1.msra.mxu0 %v261
    %492 = vmatprep.subr.mxu0 %v265
    %493 = vmatpush1.msra.mxu0 %v264
    %494 = vmatprep.subr.mxu0 %v268
    %495 = vmatpush1.msra.mxu0 %v267
    %496 = vmatprep.subr.mxu0 %v271
    %497 = vmatpush1.msra.mxu0 %v270
    %498 = vmatprep.subr.mxu0 %v274
    %499 = vmatpush1.msra.mxu0 %v273
    %500 = vmatprep.subr.mxu0 %v277
    %501 = vmatpush1.msra.mxu0 %v276
    %502 = vmatprep.subr.mxu0 %v280
    %503 = vmatpush1.msra.mxu0 %v279
    %504 = vmatprep.subr.mxu0 %v283
    %505 = vmatpush1.msra.mxu0 %v282
    %506 = vmatprep.subr.mxu0 %v286
    %507 = vmatpush1.msra.mxu0 %v285
    %508 = vmatprep.subr.mxu0 %v289
    %509 = vmatpush1.msra.mxu0 %v288
    %510 = vmatprep.subr.mxu0 %v292
    %511 = vmatpush1.msra.mxu0 %v291
    %512 = vmatprep.subr.mxu0 %v295
    %513 = vmatpush1.msra.mxu0 %v294
    %514 = vmatprep.subr.mxu0 %v298
    %515 = vmatpush1.msra.mxu0 %v297
    %516 = vmatprep.subr.mxu0 0.0
    %517 = vmatpush1.msra.mxu0 0.0
    %518 = vmatprep.subr.mxu0 0.0
    %519 = vmatpush1.msra.mxu0 0.0
    %520 = vmatprep.subr.mxu0 0.0
    %521 = vmatpush1.msra.mxu0 0.0
    %522 = vmatprep.subr.mxu0 0.0
    %523 = vmatpush1.msra.mxu0 0.0
    %524 = vmatprep.subr.mxu0 0.0
    %525 = vmatpush1.msra.mxu0 0.0
    %526 = vmatprep.subr.mxu0 0.0
    %527 = vmatpush1.msra.mxu0 0.0
    %528 = vmatprep.subr.mxu0 0.0
    %529 = vmatpush1.msra.mxu0 0.0
    %530 = vmatprep.subr.mxu0 0.0
    %531 = vmatpush1.msra.mxu0 0.0
    %532 = vmatprep.subr.mxu0 0.0
    %533 = vmatpush1.msra.mxu0 0.0
    %534 = vmatprep.subr.mxu0 0.0
    %535 = vmatpush1.msra.mxu0 0.0
    %536 = vmatprep.subr.mxu0 0.0
    %537 = vmatpush1.msra.mxu0 0.0
    %538 = vmatprep.subr.mxu0 0.0
    %539 = vmatpush1.msra.mxu0 0.0
    %540 = vmatprep.subr.mxu0 0.0
    %541 = vmatpush1.msra.mxu0 0.0
    %542 = vmatprep.subr.mxu0 0.0
    %543 = vmatpush1.msra.mxu0 0.0
    %544 = vmatprep.subr.mxu0 0.0
    %545 = vmatpush1.msra.mxu0 0.0
    %546 = vmatprep.subr.mxu0 0.0
    %547 = vmatpush1.msra.mxu0 0.0
    %548 = vmatprep.mubr.f32.mxu0 0.0
    %549 = vmatmul.mubr.f32.gmra.mrb[0].mxu0 %v483
    %v550 = vpop.f32.mrb[0].mxu0
    %v551 = vadd.f32 0.0, %v550
    %v552 = vpop.f32.mrb[0].mxu0
    %v553 = vadd.f32 0.0, %v552
    %554 = vdwg.mxu0
    %555 = vmatprep.subr.mxu0 0.0
    %556 = vmatpush1.msra.mxu0 %v254
    %557 = vmatprep.subr.mxu0 0.0
    %558 = vmatpush1.msra.mxu0 %v257
    %559 = vmatprep.subr.mxu0 0.0
    %560 = vmatpush1.msra.mxu0 %v260
    %561 = vmatprep.subr.mxu0 0.0
    %562 = vmatpush1.msra.mxu0 %v263
    %563 = vmatprep.subr.mxu0 0.0
    %564 = vmatpush1.msra.mxu0 %v266
    %565 = vmatprep.subr.mxu0 0.0
    %566 = vmatpush1.msra.mxu0 %v269
    %567 = vmatprep.subr.mxu0 0.0
    %568 = vmatpush1.msra.mxu0 %v272
    %569 = vmatprep.subr.mxu0 0.0
    %570 = vmatpush1.msra.mxu0 %v275
    %571 = vmatprep.subr.mxu0 0.0
    %572 = vmatpush1.msra.mxu0 %v278
    %573 = vmatprep.subr.mxu0 0.0
    %574 = vmatpush1.msra.mxu0 %v281
    %575 = vmatprep.subr.mxu0 0.0
    %576 = vmatpush1.msra.mxu0 %v284
    %577 = vmatprep.subr.mxu0 0.0
    %578 = vmatpush1.msra.mxu0 %v287
    %579 = vmatprep.subr.mxu0 0.0
    %580 = vmatpush1.msra.mxu0 %v290
    %581 = vmatprep.subr.mxu0 0.0
    %582 = vmatpush1.msra.mxu0 %v293
    %583 = vmatprep.subr.mxu0 0.0
    %584 = vmatpush1.msra.mxu0 %v296
    %585 = vmatprep.subr.mxu0 0.0
    %586 = vmatpush1.msra.mxu0 %v299
    %587 = vmatprep.subr.mxu0 0.0
    %588 = vmatpush1.msra.mxu0 0.0
    %589 = vmatprep.subr.mxu0 0.0
    %590 = vmatpush1.msra.mxu0 0.0
    %591 = vmatprep.subr.mxu0 0.0
    %592 = vmatpush1.msra.mxu0 0.0
    %593 = vmatprep.subr.mxu0 0.0
    %594 = vmatpush1.msra.mxu0 0.0
    %595 = vmatprep.subr.mxu0 0.0
    %596 = vmatpush1.msra.mxu0 0.0
    %597 = vmatprep.subr.mxu0 0.0
    %598 = vmatpush1.msra.mxu0 0.0
    %599 = vmatprep.subr.mxu0 0.0
    %600 = vmatpush1.msra.mxu0 0.0
    %601 = vmatprep.subr.mxu0 0.0
    %602 = vmatpush1.msra.mxu0 0.0
    %603 = vmatprep.subr.mxu0 0.0
    %604 = vmatpush1.msra.mxu0 0.0
    %605 = vmatprep.subr.mxu0 0.0
    %606 = vmatpush1.msra.mxu0 0.0
    %607 = vmatprep.subr.mxu0 0.0
    %608 = vmatpush1.msra.mxu0 0.0
    %609 = vmatprep.subr.mxu0 0.0
    %610 = vmatpush1.msra.mxu0 0.0
    %611 = vmatprep.subr.mxu0 0.0
    %612 = vmatpush1.msra.mxu0 0.0
    %613 = vmatprep.subr.mxu0 0.0
    %614 = vmatpush1.msra.mxu0 0.0
    %615 = vmatprep.subr.mxu0 0.0
    %616 = vmatpush1.msra.mxu0 0.0
    %617 = vmatprep.subr.mxu0 0.0
    %618 = vmatpush1.msra.mxu0 0.0
    %619 = vmatprep.mubr.f32.mxu0 0.0
    %620 = vmatmul.mubr.f32.gmra.mrb[0].mxu0 %v483
    %v621 = vpop.f32.mrb[0].mxu0
    %v622 = vadd.f32 0.0, %v621
    %v623 = vpop.f32.mrb[0].mxu0
    %624 = vdwg.mxu0
    %s625 = scalar_lea.vmem [#allocation2], 1
    %v626 = vld [vmem:[%s625] ss:$8 sm:$0x3]
    %v629 = vcombine.low %v551, %v553
    %v631 = vunpack.c.l.s4 1966171168
    %v632 = vunpack.c.0.s8 %v631
    %v633 = vlaneseq
    %v634 = vshrl.u32 %v633, 7
    %v635 = vsub.s32 %v632, %v634
    %v636 = vrot.slane %v629, %v635
    %v638 = vunpack.c.l.s4 1966171168
    %v639 = vunpack.c.0.s8 %v638
    %v640 = vlaneseq
    %v641 = vshrl.u32 %v640, 7
    %v642 = vsub.s32 %v639, %v641
    %v643 = vrot.slane %v636, %v642
    %v645 = vadd.f32 %v626, %v643
    %v646 = vxor.u32 %v645, 2147483648
    %v647 = vmul.f32 %v646, 1.442695
    %v648 = vpow.pop %v647
    %v649 = vadd.f32 %v648, 1.0
    %v650 = vrcp.pop %v649
    %v651 = vmul.f32 1.0, %v650
    %v652 = vld [vmem:[#allocation2 + $0x11] ss:$0 sm:$0xff]
    %v653 = vadd.f32 %v622, %v251
    %v654 = vmul.f32 %v651, %v653
    %v655 = vadd.f32 %v652, %v654
    %v656 = vtanh.pop %v655
    %v658 = vrot.slane %v651, 1
    %v660 = vsub.f32 1.0, %v658
    %v661 = vmul.f32 %v660, %v656
    %v662 = vmul.f32 %v658, %v483
    %v663 = vadd.f32 %v661, %v662
    %p664 = scmp.gt.s32.totalorder %s72, 1
    %s665 = scalar_select %p664, 1, 0
    %v666 = vstv %s665
    %vm667 = vcmp.eq.s32.totalorder %v666, 1
    %v668 = vsel %vm667, %v663, %v483
    %669 = vmatprep.subr.mxu0 %v253
    %670 = vmatpush1.msra.mxu0 %v252
    %671 = vmatprep.subr.mxu0 %v256
    %672 = vmatpush1.msra.mxu0 %v255
    %673 = vmatprep.subr.mxu0 %v259
    %674 = vmatpush1.msra.mxu0 %v258
    %675 = vmatprep.subr.mxu0 %v262
    %676 = vmatpush1.msra.mxu0 %v261
    %677 = vmatprep.subr.mxu0 %v265
    %678 = vmatpush1.msra.mxu0 %v264
    %679 = vmatprep.subr.mxu0 %v268
    %680 = vmatpush1.msra.mxu0 %v267
    %681 = vmatprep.subr.mxu0 %v271
    %682 = vmatpush1.msra.mxu0 %v270
    %683 = vmatprep.subr.mxu0 %v274
    %684 = vmatpush1.msra.mxu0 %v273
    %685 = vmatprep.subr.mxu0 %v277
    %686 = vmatpush1.msra.mxu0 %v276
    %687 = vmatprep.subr.mxu0 %v280
    %688 = vmatpush1.msra.mxu0 %v279
    %689 = vmatprep.subr.mxu0 %v283
    %690 = vmatpush1.msra.mxu0 %v282
    %691 = vmatprep.subr.mxu0 %v286
    %692 = vmatpush1.msra.mxu0 %v285
    %693 = vmatprep.subr.mxu0 %v289
    %694 = vmatpush1.msra.mxu0 %v288
    %695 = vmatprep.subr.mxu0 %v292
    %696 = vmatpush1.msra.mxu0 %v291
    %697 = vmatprep.subr.mxu0 %v295
    %698 = vmatpush1.msra.mxu0 %v294
    %699 = vmatprep.subr.mxu0 %v298
    %700 = vmatpush1.msra.mxu0 %v297
    %701 = vmatprep.subr.mxu0 0.0
    %702 = vmatpush1.msra.mxu0 0.0
    %703 = vmatprep.subr.mxu0 0.0
    %704 = vmatpush1.msra.mxu0 0.0
    %705 = vmatprep.subr.mxu0 0.0
    %706 = vmatpush1.msra.mxu0 0.0
    %707 = vmatprep.subr.mxu0 0.0
    %708 = vmatpush1.msra.mxu0 0.0
    %709 = vmatprep.subr.mxu0 0.0
    %710 = vmatpush1.msra.mxu0 0.0
    %711 = vmatprep.subr.mxu0 0.0
    %712 = vmatpush1.msra.mxu0 0.0
    %713 = vmatprep.subr.mxu0 0.0
    %714 = vmatpush1.msra.mxu0 0.0
    %715 = vmatprep.subr.mxu0 0.0
    %716 = vmatpush1.msra.mxu0 0.0
    %717 = vmatprep.subr.mxu0 0.0
    %718 = vmatpush1.msra.mxu0 0.0
    %719 = vmatprep.subr.mxu0 0.0
    %720 = vmatpush1.msra.mxu0 0.0
    %721 = vmatprep.subr.mxu0 0.0
    %722 = vmatpush1.msra.mxu0 0.0
    %723 = vmatprep.subr.mxu0 0.0
    %724 = vmatpush1.msra.mxu0 0.0
    %725 = vmatprep.subr.mxu0 0.0
    %726 = vmatpush1.msra.mxu0 0.0
    %727 = vmatprep.subr.mxu0 0.0
    %728 = vmatpush1.msra.mxu0 0.0
    %729 = vmatprep.subr.mxu0 0.0
    %730 = vmatpush1.msra.mxu0 0.0
    %731 = vmatprep.subr.mxu0 0.0
    %732 = vmatpush1.msra.mxu0 0.0
    %733 = vmatprep.mubr.f32.mxu0 0.0
    %734 = vmatmul.mubr.f32.gmra.mrb[0].mxu0 %v668
    %v735 = vpop.f32.mrb[0].mxu0
    %v736 = vadd.f32 0.0, %v735
    %v737 = vpop.f32.mrb[0].mxu0
    %v738 = vadd.f32 0.0, %v737
    %739 = vdwg.mxu0
    %740 = vmatprep.subr.mxu0 0.0
    %741 = vmatpush1.msra.mxu0 %v254
    %742 = vmatprep.subr.mxu0 0.0
    %743 = vmatpush1.msra.mxu0 %v257
    %744 = vmatprep.subr.mxu0 0.0
    %745 = vmatpush1.msra.mxu0 %v260
    %746 = vmatprep.subr.mxu0 0.0
    %747 = vmatpush1.msra.mxu0 %v263
    %748 = vmatprep.subr.mxu0 0.0
    %749 = vmatpush1.msra.mxu0 %v266
    %750 = vmatprep.subr.mxu0 0.0
    %751 = vmatpush1.msra.mxu0 %v269
    %752 = vmatprep.subr.mxu0 0.0
    %753 = vmatpush1.msra.mxu0 %v272
    %754 = vmatprep.subr.mxu0 0.0
    %755 = vmatpush1.msra.mxu0 %v275
    %756 = vmatprep.subr.mxu0 0.0
    %757 = vmatpush1.msra.mxu0 %v278
    %758 = vmatprep.subr.mxu0 0.0
    %759 = vmatpush1.msra.mxu0 %v281
    %760 = vmatprep.subr.mxu0 0.0
    %761 = vmatpush1.msra.mxu0 %v284
    %762 = vmatprep.subr.mxu0 0.0
    %763 = vmatpush1.msra.mxu0 %v287
    %764 = vmatprep.subr.mxu0 0.0
    %765 = vmatpush1.msra.mxu0 %v290
    %766 = vmatprep.subr.mxu0 0.0
    %767 = vmatpush1.msra.mxu0 %v293
    %768 = vmatprep.subr.mxu0 0.0
    %769 = vmatpush1.msra.mxu0 %v296
    %770 = vmatprep.subr.mxu0 0.0
    %771 = vmatpush1.msra.mxu0 %v299
    %772 = vmatprep.subr.mxu0 0.0
    %773 = vmatpush1.msra.mxu0 0.0
    %774 = vmatprep.subr.mxu0 0.0
    %775 = vmatpush1.msra.mxu0 0.0
    %776 = vmatprep.subr.mxu0 0.0
    %777 = vmatpush1.msra.mxu0 0.0
    %778 = vmatprep.subr.mxu0 0.0
    %779 = vmatpush1.msra.mxu0 0.0
    %780 = vmatprep.subr.mxu0 0.0
    %781 = vmatpush1.msra.mxu0 0.0
    %782 = vmatprep.subr.mxu0 0.0
    %783 = vmatpush1.msra.mxu0 0.0
    %784 = vmatprep.subr.mxu0 0.0
    %785 = vmatpush1.msra.mxu0 0.0
    %786 = vmatprep.subr.mxu0 0.0
    %787 = vmatpush1.msra.mxu0 0.0
    %788 = vmatprep.subr.mxu0 0.0
    %789 = vmatpush1.msra.mxu0 0.0
    %790 = vmatprep.subr.mxu0 0.0
    %791 = vmatpush1.msra.mxu0 0.0
    %792 = vmatprep.subr.mxu0 0.0
    %793 = vmatpush1.msra.mxu0 0.0
    %794 = vmatprep.subr.mxu0 0.0
    %795 = vmatpush1.msra.mxu0 0.0
    %796 = vmatprep.subr.mxu0 0.0
    %797 = vmatpush1.msra.mxu0 0.0
    %798 = vmatprep.subr.mxu0 0.0
    %799 = vmatpush1.msra.mxu0 0.0
    %800 = vmatprep.subr.mxu0 0.0
    %801 = vmatpush1.msra.mxu0 0.0
    %802 = vmatprep.subr.mxu0 0.0
    %803 = vmatpush1.msra.mxu0 0.0
    %804 = vmatprep.mubr.f32.mxu0 0.0
    %805 = vmatmul.mubr.f32.gmra.mrb[0].mxu0 %v668
    %v806 = vpop.f32.mrb[0].mxu0
    %v807 = vadd.f32 0.0, %v806
    %v808 = vpop.f32.mrb[0].mxu0
    %809 = vdwg.mxu0
    %s810 = scalar_lea.vmem [#allocation2], 2
    %v811 = vld [vmem:[%s810] ss:$8 sm:$0x3]
    %v814 = vcombine.low %v736, %v738
    %v816 = vunpack.c.l.s4 1966171168
    %v817 = vunpack.c.0.s8 %v816
    %v818 = vlaneseq
    %v819 = vshrl.u32 %v818, 7
    %v820 = vsub.s32 %v817, %v819
    %v821 = vrot.slane %v814, %v820
    %v823 = vunpack.c.l.s4 1966171168
    %v824 = vunpack.c.0.s8 %v823
    %v825 = vlaneseq
    %v826 = vshrl.u32 %v825, 7
    %v827 = vsub.s32 %v824, %v826
    %v828 = vrot.slane %v821, %v827
    %v830 = vadd.f32 %v811, %v828
    %v831 = vxor.u32 %v830, 2147483648
    %v832 = vmul.f32 %v831, 1.442695
    %v833 = vpow.pop %v832
    %v834 = vadd.f32 %v833, 1.0
    %v835 = vrcp.pop %v834
    %v836 = vmul.f32 1.0, %v835
    %v837 = vld [vmem:[#allocation2 + $0x12] ss:$0 sm:$0xff]
    %v838 = vadd.f32 %v807, %v251
    %v839 = vmul.f32 %v836, %v838
    %v840 = vadd.f32 %v837, %v839
    %v841 = vtanh.pop %v840
    %v843 = vrot.slane %v836, 1
    %v845 = vsub.f32 1.0, %v843
    %v846 = vmul.f32 %v845, %v841
    %v847 = vmul.f32 %v843, %v668
    %v848 = vadd.f32 %v846, %v847
    %p849 = scmp.gt.s32.totalorder %s72, 2
    %s850 = scalar_select %p849, 1, 0
    %v851 = vstv %s850
    %vm852 = vcmp.eq.s32.totalorder %v851, 1
    %v853 = vsel %vm852, %v848, %v668
    %854 = vmatprep.subr.mxu0 %v253
    %855 = vmatpush1.msra.mxu0 %v252
    %856 = vmatprep.subr.mxu0 %v256
    %857 = vmatpush1.msra.mxu0 %v255
    %858 = vmatprep.subr.mxu0 %v259
    %859 = vmatpush1.msra.mxu0 %v258
    %860 = vmatprep.subr.mxu0 %v262
    %861 = vmatpush1.msra.mxu0 %v261
    %862 = vmatprep.subr.mxu0 %v265
    %863 = vmatpush1.msra.mxu0 %v264
    %864 = vmatprep.subr.mxu0 %v268
    %865 = vmatpush1.msra.mxu0 %v267
    %866 = vmatprep.subr.mxu0 %v271
    %867 = vmatpush1.msra.mxu0 %v270
    %868 = vmatprep.subr.mxu0 %v274
    %869 = vmatpush1.msra.mxu0 %v273
    %870 = vmatprep.subr.mxu0 %v277
    %871 = vmatpush1.msra.mxu0 %v276
    %872 = vmatprep.subr.mxu0 %v280
    %873 = vmatpush1.msra.mxu0 %v279
    %874 = vmatprep.subr.mxu0 %v283
    %875 = vmatpush1.msra.mxu0 %v282
    %876 = vmatprep.subr.mxu0 %v286
    %877 = vmatpush1.msra.mxu0 %v285
    %878 = vmatprep.subr.mxu0 %v289
    %879 = vmatpush1.msra.mxu0 %v288
    %880 = vmatprep.subr.mxu0 %v292
    %881 = vmatpush1.msra.mxu0 %v291
    %882 = vmatprep.subr.mxu0 %v295
    %883 = vmatpush1.msra.mxu0 %v294
    %884 = vmatprep.subr.mxu0 %v298
    %885 = vmatpush1.msra.mxu0 %v297
    %886 = vmatprep.subr.mxu0 0.0
    %887 = vmatpush1.msra.mxu0 0.0
    %888 = vmatprep.subr.mxu0 0.0
    %889 = vmatpush1.msra.mxu0 0.0
    %890 = vmatprep.subr.mxu0 0.0
    %891 = vmatpush1.msra.mxu0 0.0
    %892 = vmatprep.subr.mxu0 0.0
    %893 = vmatpush1.msra.mxu0 0.0
    %894 = vmatprep.subr.mxu0 0.0
    %895 = vmatpush1.msra.mxu0 0.0
    %896 = vmatprep.subr.mxu0 0.0
    %897 = vmatpush1.msra.mxu0 0.0
    %898 = vmatprep.subr.mxu0 0.0
    %899 = vmatpush1.msra.mxu0 0.0
    %900 = vmatprep.subr.mxu0 0.0
    %901 = vmatpush1.msra.mxu0 0.0
    %902 = vmatprep.subr.mxu0 0.0
    %903 = vmatpush1.msra.mxu0 0.0
    %904 = vmatprep.subr.mxu0 0.0
    %905 = vmatpush1.msra.mxu0 0.0
    %906 = vmatprep.subr.mxu0 0.0
    %907 = vmatpush1.msra.mxu0 0.0
    %908 = vmatprep.subr.mxu0 0.0
    %909 = vmatpush1.msra.mxu0 0.0
    %910 = vmatprep.subr.mxu0 0.0
    %911 = vmatpush1.msra.mxu0 0.0
    %912 = vmatprep.subr.mxu0 0.0
    %913 = vmatpush1.msra.mxu0 0.0
    %914 = vmatprep.subr.mxu0 0.0
    %915 = vmatpush1.msra.mxu0 0.0
    %916 = vmatprep.subr.mxu0 0.0
    %917 = vmatpush1.msra.mxu0 0.0
    %918 = vmatprep.mubr.f32.mxu0 0.0
    %919 = vmatmul.mubr.f32.gmra.mrb[0].mxu0 %v853
    %v920 = vpop.f32.mrb[0].mxu0
    %v921 = vadd.f32 0.0, %v920
    %v922 = vpop.f32.mrb[0].mxu0
    %v923 = vadd.f32 0.0, %v922
    %924 = vdwg.mxu0
    %925 = vmatprep.subr.mxu0 0.0
    %926 = vmatpush1.msra.mxu0 %v254
    %927 = vmatprep.subr.mxu0 0.0
    %928 = vmatpush1.msra.mxu0 %v257
    %929 = vmatprep.subr.mxu0 0.0
    %930 = vmatpush1.msra.mxu0 %v260
    %931 = vmatprep.subr.mxu0 0.0
    %932 = vmatpush1.msra.mxu0 %v263
    %933 = vmatprep.subr.mxu0 0.0
    %934 = vmatpush1.msra.mxu0 %v266
    %935 = vmatprep.subr.mxu0 0.0
    %936 = vmatpush1.msra.mxu0 %v269
    %937 = vmatprep.subr.mxu0 0.0
    %938 = vmatpush1.msra.mxu0 %v272
    %939 = vmatprep.subr.mxu0 0.0
    %940 = vmatpush1.msra.mxu0 %v275
    %941 = vmatprep.subr.mxu0 0.0
    %942 = vmatpush1.msra.mxu0 %v278
    %943 = vmatprep.subr.mxu0 0.0
    %944 = vmatpush1.msra.mxu0 %v281
    %945 = vmatprep.subr.mxu0 0.0
    %946 = vmatpush1.msra.mxu0 %v284
    %947 = vmatprep.subr.mxu0 0.0
    %948 = vmatpush1.msra.mxu0 %v287
    %949 = vmatprep.subr.mxu0 0.0
    %950 = vmatpush1.msra.mxu0 %v290
    %951 = vmatprep.subr.mxu0 0.0
    %952 = vmatpush1.msra.mxu0 %v293
    %953 = vmatprep.subr.mxu0 0.0
    %954 = vmatpush1.msra.mxu0 %v296
    %955 = vmatprep.subr.mxu0 0.0
    %956 = vmatpush1.msra.mxu0 %v299
    %957 = vmatprep.subr.mxu0 0.0
    %958 = vmatpush1.msra.mxu0 0.0
    %959 = vmatprep.subr.mxu0 0.0
    %960 = vmatpush1.msra.mxu0 0.0
    %961 = vmatprep.subr.mxu0 0.0
    %962 = vmatpush1.msra.mxu0 0.0
    %963 = vmatprep.subr.mxu0 0.0
    %964 = vmatpush1.msra.mxu0 0.0
    %965 = vmatprep.subr.mxu0 0.0
    %966 = vmatpush1.msra.mxu0 0.0
    %967 = vmatprep.subr.mxu0 0.0
    %968 = vmatpush1.msra.mxu0 0.0
    %969 = vmatprep.subr.mxu0 0.0
    %970 = vmatpush1.msra.mxu0 0.0
    %971 = vmatprep.subr.mxu0 0.0
    %972 = vmatpush1.msra.mxu0 0.0
    %973 = vmatprep.subr.mxu0 0.0
    %974 = vmatpush1.msra.mxu0 0.0
    %975 = vmatprep.subr.mxu0 0.0
    %976 = vmatpush1.msra.mxu0 0.0
    %977 = vmatprep.subr.mxu0 0.0
    %978 = vmatpush1.msra.mxu0 0.0
    %979 = vmatprep.subr.mxu0 0.0
    %980 = vmatpush1.msra.mxu0 0.0
    %981 = vmatprep.subr.mxu0 0.0
    %982 = vmatpush1.msra.mxu0 0.0
    %983 = vmatprep.subr.mxu0 0.0
    %984 = vmatpush1.msra.mxu0 0.0
    %985 = vmatprep.subr.mxu0 0.0
    %986 = vmatpush1.msra.mxu0 0.0
    %987 = vmatprep.subr.mxu0 0.0
    %988 = vmatpush1.msra.mxu0 0.0
    %989 = vmatprep.mubr.f32.mxu0 0.0
    %990 = vmatmul.mubr.f32.gmra.mrb[0].mxu0 %v853
    %v991 = vpop.f32.mrb[0].mxu0
    %v992 = vadd.f32 0.0, %v991
    %v993 = vpop.f32.mrb[0].mxu0
    %994 = vdwg.mxu0
    %s995 = scalar_lea.vmem [#allocation2], 3
    %v996 = vld [vmem:[%s995] ss:$8 sm:$0x3]
    %v999 = vcombine.low %v921, %v923
    %v1001 = vunpack.c.l.s4 1966171168
    %v1002 = vunpack.c.0.s8 %v1001
    %v1003 = vlaneseq
    %v1004 = vshrl.u32 %v1003, 7
    %v1005 = vsub.s32 %v1002, %v1004
    %v1006 = vrot.slane %v999, %v1005
    %v1008 = vunpack.c.l.s4 1966171168
    %v1009 = vunpack.c.0.s8 %v1008
    %v1010 = vlaneseq
    %v1011 = vshrl.u32 %v1010, 7
    %v1012 = vsub.s32 %v1009, %v1011
    %v1013 = vrot.slane %v1006, %v1012
    %v1015 = vadd.f32 %v996, %v1013
    %v1016 = vxor.u32 %v1015, 2147483648
    %v1017 = vmul.f32 %v1016, 1.442695
    %v1018 = vpow.pop %v1017
    %v1019 = vadd.f32 %v1018, 1.0
    %v1020 = vrcp.pop %v1019
    %v1021 = vmul.f32 1.0, %v1020
    %v1022 = vld [vmem:[#allocation2 + $0x13] ss:$0 sm:$0xff]
    %v1023 = vadd.f32 %v992, %v251
    %v1024 = vmul.f32 %v1021, %v1023
    %v1025 = vadd.f32 %v1022, %v1024
    %v1026 = vtanh.pop %v1025
    %v1028 = vrot.slane %v1021, 1
    %v1030 = vsub.f32 1.0, %v1028
    %v1031 = vmul.f32 %v1030, %v1026
    %v1032 = vmul.f32 %v1028, %v853
    %v1033 = vadd.f32 %v1031, %v1032
    %p1034 = scmp.gt.s32.totalorder %s72, 3
    %s1035 = scalar_select %p1034, 1, 0
    %v1036 = vstv %s1035
    %vm1037 = vcmp.eq.s32.totalorder %v1036, 1
    %v1038 = vsel %vm1037, %v1033, %v853
    %1039 = vmatprep.subr.mxu0 %v253
    %1040 = vmatpush1.msra.mxu0 %v252
    %1041 = vmatprep.subr.mxu0 %v256
    %1042 = vmatpush1.msra.mxu0 %v255
    %1043 = vmatprep.subr.mxu0 %v259
    %1044 = vmatpush1.msra.mxu0 %v258
    %1045 = vmatprep.subr.mxu0 %v262
    %1046 = vmatpush1.msra.mxu0 %v261
    %1047 = vmatprep.subr.mxu0 %v265
    %1048 = vmatpush1.msra.mxu0 %v264
    %1049 = vmatprep.subr.mxu0 %v268
    %1050 = vmatpush1.msra.mxu0 %v267
    %1051 = vmatprep.subr.mxu0 %v271
    %1052 = vmatpush1.msra.mxu0 %v270
    %1053 = vmatprep.subr.mxu0 %v274
    %1054 = vmatpush1.msra.mxu0 %v273
    %1055 = vmatprep.subr.mxu0 %v277
    %1056 = vmatpush1.msra.mxu0 %v276
    %1057 = vmatprep.subr.mxu0 %v280
    %1058 = vmatpush1.msra.mxu0 %v279
    %1059 = vmatprep.subr.mxu0 %v283
    %1060 = vmatpush1.msra.mxu0 %v282
    %1061 = vmatprep.subr.mxu0 %v286
    %1062 = vmatpush1.msra.mxu0 %v285
    %1063 = vmatprep.subr.mxu0 %v289
    %1064 = vmatpush1.msra.mxu0 %v288
    %1065 = vmatprep.subr.mxu0 %v292
    %1066 = vmatpush1.msra.mxu0 %v291
    %1067 = vmatprep.subr.mxu0 %v295
    %1068 = vmatpush1.msra.mxu0 %v294
    %1069 = vmatprep.subr.mxu0 %v298
    %1070 = vmatpush1.msra.mxu0 %v297
    %1071 = vmatprep.subr.mxu0 0.0
    %1072 = vmatpush1.msra.mxu0 0.0
    %1073 = vmatprep.subr.mxu0 0.0
    %1074 = vmatpush1.msra.mxu0 0.0
    %1075 = vmatprep.subr.mxu0 0.0
    %1076 = vmatpush1.msra.mxu0 0.0
    %1077 = vmatprep.subr.mxu0 0.0
    %1078 = vmatpush1.msra.mxu0 0.0
    %1079 = vmatprep.subr.mxu0 0.0
    %1080 = vmatpush1.msra.mxu0 0.0
    %1081 = vmatprep.subr.mxu0 0.0
    %1082 = vmatpush1.msra.mxu0 0.0
    %1083 = vmatprep.subr.mxu0 0.0
    %1084 = vmatpush1.msra.mxu0 0.0
    %1085 = vmatprep.subr.mxu0 0.0
    %1086 = vmatpush1.msra.mxu0 0.0
    %1087 = vmatprep.subr.mxu0 0.0
    %1088 = vmatpush1.msra.mxu0 0.0
    %1089 = vmatprep.subr.mxu0 0.0
    %1090 = vmatpush1.msra.mxu0 0.0
    %1091 = vmatprep.subr.mxu0 0.0
    %1092 = vmatpush1.msra.mxu0 0.0
    %1093 = vmatprep.subr.mxu0 0.0
    %1094 = vmatpush1.msra.mxu0 0.0
    %1095 = vmatprep.subr.mxu0 0.0
    %1096 = vmatpush1.msra.mxu0 0.0
    %1097 = vmatprep.subr.mxu0 0.0
    %1098 = vmatpush1.msra.mxu0 0.0
    %1099 = vmatprep.subr.mxu0 0.0
    %1100 = vmatpush1.msra.mxu0 0.0
    %1101 = vmatprep.subr.mxu0 0.0
    %1102 = vmatpush1.msra.mxu0 0.0
    %1103 = vmatprep.mubr.f32.mxu0 0.0
    %1104 = vmatmul.mubr.f32.gmra.mrb[0].mxu0 %v1038
    %v1105 = vpop.f32.mrb[0].mxu0
    %v1106 = vadd.f32 0.0, %v1105
    %v1107 = vpop.f32.mrb[0].mxu0
    %v1108 = vadd.f32 0.0, %v1107
    %1109 = vdwg.mxu0
    %1110 = vmatprep.subr.mxu0 0.0
    %1111 = vmatpush1.msra.mxu0 %v254
    %1112 = vmatprep.subr.mxu0 0.0
    %1113 = vmatpush1.msra.mxu0 %v257
    %1114 = vmatprep.subr.mxu0 0.0
    %1115 = vmatpush1.msra.mxu0 %v260
    %1116 = vmatprep.subr.mxu0 0.0
    %1117 = vmatpush1.msra.mxu0 %v263
    %1118 = vmatprep.subr.mxu0 0.0
    %1119 = vmatpush1.msra.mxu0 %v266
    %1120 = vmatprep.subr.mxu0 0.0
    %1121 = vmatpush1.msra.mxu0 %v269
    %1122 = vmatprep.subr.mxu0 0.0
    %1123 = vmatpush1.msra.mxu0 %v272
    %1124 = vmatprep.subr.mxu0 0.0
    %1125 = vmatpush1.msra.mxu0 %v275
    %1126 = vmatprep.subr.mxu0 0.0
    %1127 = vmatpush1.msra.mxu0 %v278
    %1128 = vmatprep.subr.mxu0 0.0
    %1129 = vmatpush1.msra.mxu0 %v281
    %1130 = vmatprep.subr.mxu0 0.0
    %1131 = vmatpush1.msra.mxu0 %v284
    %1132 = vmatprep.subr.mxu0 0.0
    %1133 = vmatpush1.msra.mxu0 %v287
    %1134 = vmatprep.subr.mxu0 0.0
    %1135 = vmatpush1.msra.mxu0 %v290
    %1136 = vmatprep.subr.mxu0 0.0
    %1137 = vmatpush1.msra.mxu0 %v293
    %1138 = vmatprep.subr.mxu0 0.0
    %1139 = vmatpush1.msra.mxu0 %v296
    %1140 = vmatprep.subr.mxu0 0.0
    %1141 = vmatpush1.msra.mxu0 %v299
    %1142 = vmatprep.subr.mxu0 0.0
    %1143 = vmatpush1.msra.mxu0 0.0
    %1144 = vmatprep.subr.mxu0 0.0
    %1145 = vmatpush1.msra.mxu0 0.0
    %1146 = vmatprep.subr.mxu0 0.0
    %1147 = vmatpush1.msra.mxu0 0.0
    %1148 = vmatprep.subr.mxu0 0.0
    %1149 = vmatpush1.msra.mxu0 0.0
    %1150 = vmatprep.subr.mxu0 0.0
    %1151 = vmatpush1.msra.mxu0 0.0
    %1152 = vmatprep.subr.mxu0 0.0
    %1153 = vmatpush1.msra.mxu0 0.0
    %1154 = vmatprep.subr.mxu0 0.0
    %1155 = vmatpush1.msra.mxu0 0.0
    %1156 = vmatprep.subr.mxu0 0.0
    %1157 = vmatpush1.msra.mxu0 0.0
    %1158 = vmatprep.subr.mxu0 0.0
    %1159 = vmatpush1.msra.mxu0 0.0
    %1160 = vmatprep.subr.mxu0 0.0
    %1161 = vmatpush1.msra.mxu0 0.0
    %1162 = vmatprep.subr.mxu0 0.0
    %1163 = vmatpush1.msra.mxu0 0.0
    %1164 = vmatprep.subr.mxu0 0.0
    %1165 = vmatpush1.msra.mxu0 0.0
    %1166 = vmatprep.subr.mxu0 0.0
    %1167 = vmatpush1.msra.mxu0 0.0
    %1168 = vmatprep.subr.mxu0 0.0
    %1169 = vmatpush1.msra.mxu0 0.0
    %1170 = vmatprep.subr.mxu0 0.0
    %1171 = vmatpush1.msra.mxu0 0.0
    %1172 = vmatprep.subr.mxu0 0.0
    %1173 = vmatpush1.msra.mxu0 0.0
    %1174 = vmatprep.mubr.f32.mxu0 0.0
    %1175 = vmatmul.mubr.f32.gmra.mrb[0].mxu0 %v1038
    %v1176 = vpop.f32.mrb[0].mxu0
    %v1177 = vadd.f32 0.0, %v1176
    %v1178 = vpop.f32.mrb[0].mxu0
    %1179 = vdwg.mxu0
    %s1180 = scalar_lea.vmem [#allocation2], 4
    %v1181 = vld [vmem:[%s1180] ss:$8 sm:$0x3]
    %v1184 = vcombine.low %v1106, %v1108
    %v1186 = vunpack.c.l.s4 1966171168
    %v1187 = vunpack.c.0.s8 %v1186
    %v1188 = vlaneseq
    %v1189 = vshrl.u32 %v1188, 7
    %v1190 = vsub.s32 %v1187, %v1189
    %v1191 = vrot.slane %v1184, %v1190
    %v1193 = vunpack.c.l.s4 1966171168
    %v1194 = vunpack.c.0.s8 %v1193
    %v1195 = vlaneseq
    %v1196 = vshrl.u32 %v1195, 7
    %v1197 = vsub.s32 %v1194, %v1196
    %v1198 = vrot.slane %v1191, %v1197
    %v1200 = vadd.f32 %v1181, %v1198
    %v1201 = vxor.u32 %v1200, 2147483648
    %v1202 = vmul.f32 %v1201, 1.442695
    %v1203 = vpow.pop %v1202
    %v1204 = vadd.f32 %v1203, 1.0
    %v1205 = vrcp.pop %v1204
    %v1206 = vmul.f32 1.0, %v1205
    %v1207 = vld [vmem:[#allocation2 + $0x14] ss:$0 sm:$0xff]
    %v1208 = vadd.f32 %v1177, %v251
    %v1209 = vmul.f32 %v1206, %v1208
    %v1210 = vadd.f32 %v1207, %v1209
    %v1211 = vtanh.pop %v1210
    %v1213 = vrot.slane %v1206, 1
    %v1215 = vsub.f32 1.0, %v1213
    %v1216 = vmul.f32 %v1215, %v1211
    %v1217 = vmul.f32 %v1213, %v1038
    %v1218 = vadd.f32 %v1216, %v1217
    %p1219 = scmp.gt.s32.totalorder %s72, 4
    %s1220 = scalar_select %p1219, 1, 0
    %v1221 = vstv %s1220
    %vm1222 = vcmp.eq.s32.totalorder %v1221, 1
    %v1223 = vsel %vm1222, %v1218, %v1038
    %1224 = vmatprep.subr.mxu0 %v253
    %1225 = vmatpush1.msra.mxu0 %v252
    %1226 = vmatprep.subr.mxu0 %v256
    %1227 = vmatpush1.msra.mxu0 %v255
    %1228 = vmatprep.subr.mxu0 %v259
    %1229 = vmatpush1.msra.mxu0 %v258
    %1230 = vmatprep.subr.mxu0 %v262
    %1231 = vmatpush1.msra.mxu0 %v261
    %1232 = vmatprep.subr.mxu0 %v265
    %1233 = vmatpush1.msra.mxu0 %v264
    %1234 = vmatprep.subr.mxu0 %v268
    %1235 = vmatpush1.msra.mxu0 %v267
    %1236 = vmatprep.subr.mxu0 %v271
    %1237 = vmatpush1.msra.mxu0 %v270
    %1238 = vmatprep.subr.mxu0 %v274
    %1239 = vmatpush1.msra.mxu0 %v273
    %1240 = vmatprep.subr.mxu0 %v277
    %1241 = vmatpush1.msra.mxu0 %v276
    %1242 = vmatprep.subr.mxu0 %v280
    %1243 = vmatpush1.msra.mxu0 %v279
    %1244 = vmatprep.subr.mxu0 %v283
    %1245 = vmatpush1.msra.mxu0 %v282
    %1246 = vmatprep.subr.mxu0 %v286
    %1247 = vmatpush1.msra.mxu0 %v285
    %1248 = vmatprep.subr.mxu0 %v289
    %1249 = vmatpush1.msra.mxu0 %v288
    %1250 = vmatprep.subr.mxu0 %v292
    %1251 = vmatpush1.msra.mxu0 %v291
    %1252 = vmatprep.subr.mxu0 %v295
    %1253 = vmatpush1.msra.mxu0 %v294
    %1254 = vmatprep.subr.mxu0 %v298
    %1255 = vmatpush1.msra.mxu0 %v297
    %1256 = vmatprep.subr.mxu0 0.0
    %1257 = vmatpush1.msra.mxu0 0.0
    %1258 = vmatprep.subr.mxu0 0.0
    %1259 = vmatpush1.msra.mxu0 0.0
    %1260 = vmatprep.subr.mxu0 0.0
    %1261 = vmatpush1.msra.mxu0 0.0
    %1262 = vmatprep.subr.mxu0 0.0
    %1263 = vmatpush1.msra.mxu0 0.0
    %1264 = vmatprep.subr.mxu0 0.0
    %1265 = vmatpush1.msra.mxu0 0.0
    %1266 = vmatprep.subr.mxu0 0.0
    %1267 = vmatpush1.msra.mxu0 0.0
    %1268 = vmatprep.subr.mxu0 0.0
    %1269 = vmatpush1.msra.mxu0 0.0
    %1270 = vmatprep.subr.mxu0 0.0
    %1271 = vmatpush1.msra.mxu0 0.0
    %1272 = vmatprep.subr.mxu0 0.0
    %1273 = vmatpush1.msra.mxu0 0.0
    %1274 = vmatprep.subr.mxu0 0.0
    %1275 = vmatpush1.msra.mxu0 0.0
    %1276 = vmatprep.subr.mxu0 0.0
    %1277 = vmatpush1.msra.mxu0 0.0
    %1278 = vmatprep.subr.mxu0 0.0
    %1279 = vmatpush1.msra.mxu0 0.0
    %1280 = vmatprep.subr.mxu0 0.0
    %1281 = vmatpush1.msra.mxu0 0.0
    %1282 = vmatprep.subr.mxu0 0.0
    %1283 = vmatpush1.msra.mxu0 0.0
    %1284 = vmatprep.subr.mxu0 0.0
    %1285 = vmatpush1.msra.mxu0 0.0
    %1286 = vmatprep.subr.mxu0 0.0
    %1287 = vmatpush1.msra.mxu0 0.0
    %1288 = vmatprep.mubr.f32.mxu0 0.0
    %1289 = vmatmul.mubr.f32.gmra.mrb[0].mxu0 %v1223
    %v1290 = vpop.f32.mrb[0].mxu0
    %v1291 = vadd.f32 0.0, %v1290
    %v1292 = vpop.f32.mrb[0].mxu0
    %v1293 = vadd.f32 0.0, %v1292
    %1294 = vdwg.mxu0
    %1295 = vmatprep.subr.mxu0 0.0
    %1296 = vmatpush1.msra.mxu0 %v254
    %1297 = vmatprep.subr.mxu0 0.0
    %1298 = vmatpush1.msra.mxu0 %v257
    %1299 = vmatprep.subr.mxu0 0.0
    %1300 = vmatpush1.msra.mxu0 %v260
    %1301 = vmatprep.subr.mxu0 0.0
    %1302 = vmatpush1.msra.mxu0 %v263
    %1303 = vmatprep.subr.mxu0 0.0
    %1304 = vmatpush1.msra.mxu0 %v266
    %1305 = vmatprep.subr.mxu0 0.0
    %1306 = vmatpush1.msra.mxu0 %v269
    %1307 = vmatprep.subr.mxu0 0.0
    %1308 = vmatpush1.msra.mxu0 %v272
    %1309 = vmatprep.subr.mxu0 0.0
    %1310 = vmatpush1.msra.mxu0 %v275
    %1311 = vmatprep.subr.mxu0 0.0
    %1312 = vmatpush1.msra.mxu0 %v278
    %1313 = vmatprep.subr.mxu0 0.0
    %1314 = vmatpush1.msra.mxu0 %v281
    %1315 = vmatprep.subr.mxu0 0.0
    %1316 = vmatpush1.msra.mxu0 %v284
    %1317 = vmatprep.subr.mxu0 0.0
    %1318 = vmatpush1.msra.mxu0 %v287
    %1319 = vmatprep.subr.mxu0 0.0
    %1320 = vmatpush1.msra.mxu0 %v290
    %1321 = vmatprep.subr.mxu0 0.0
    %1322 = vmatpush1.msra.mxu0 %v293
    %1323 = vmatprep.subr.mxu0 0.0
    %1324 = vmatpush1.msra.mxu0 %v296
    %1325 = vmatprep.subr.mxu0 0.0
    %1326 = vmatpush1.msra.mxu0 %v299
    %1327 = vmatprep.subr.mxu0 0.0
    %1328 = vmatpush1.msra.mxu0 0.0
    %1329 = vmatprep.subr.mxu0 0.0
    %1330 = vmatpush1.msra.mxu0 0.0
    %1331 = vmatprep.subr.mxu0 0.0
    %1332 = vmatpush1.msra.mxu0 0.0
    %1333 = vmatprep.subr.mxu0 0.0
    %1334 = vmatpush1.msra.mxu0 0.0
    %1335 = vmatprep.subr.mxu0 0.0
    %1336 = vmatpush1.msra.mxu0 0.0
    %1337 = vmatprep.subr.mxu0 0.0
    %1338 = vmatpush1.msra.mxu0 0.0
    %1339 = vmatprep.subr.mxu0 0.0
    %1340 = vmatpush1.msra.mxu0 0.0
    %1341 = vmatprep.subr.mxu0 0.0
    %1342 = vmatpush1.msra.mxu0 0.0
    %1343 = vmatprep.subr.mxu0 0.0
    %1344 = vmatpush1.msra.mxu0 0.0
    %1345 = vmatprep.subr.mxu0 0.0
    %1346 = vmatpush1.msra.mxu0 0.0
    %1347 = vmatprep.subr.mxu0 0.0
    %1348 = vmatpush1.msra.mxu0 0.0
    %1349 = vmatprep.subr.mxu0 0.0
    %1350 = vmatpush1.msra.mxu0 0.0
    %1351 = vmatprep.subr.mxu0 0.0
    %1352 = vmatpush1.msra.mxu0 0.0
    %1353 = vmatprep.subr.mxu0 0.0
    %1354 = vmatpush1.msra.mxu0 0.0
    %1355 = vmatprep.subr.mxu0 0.0
    %1356 = vmatpush1.msra.mxu0 0.0
    %1357 = vmatprep.subr.mxu0 0.0
    %1358 = vmatpush1.msra.mxu0 0.0
    %1359 = vmatprep.mubr.f32.mxu0 0.0
    %1360 = vmatmul.mubr.f32.gmra.mrb[0].mxu0 %v1223
    %v1361 = vpop.f32.mrb[0].mxu0
    %v1362 = vadd.f32 0.0, %v1361
    %v1363 = vpop.f32.mrb[0].mxu0
    %1364 = vdwg.mxu0
    %s1365 = scalar_lea.vmem [#allocation2], 5
    %v1366 = vld [vmem:[%s1365] ss:$8 sm:$0x3]
    %v1369 = vcombine.low %v1291, %v1293
    %v1371 = vunpack.c.l.s4 1966171168
    %v1372 = vunpack.c.0.s8 %v1371
    %v1373 = vlaneseq
    %v1374 = vshrl.u32 %v1373, 7
    %v1375 = vsub.s32 %v1372, %v1374
    %v1376 = vrot.slane %v1369, %v1375
    %v1378 = vunpack.c.l.s4 1966171168
    %v1379 = vunpack.c.0.s8 %v1378
    %v1380 = vlaneseq
    %v1381 = vshrl.u32 %v1380, 7
    %v1382 = vsub.s32 %v1379, %v1381
    %v1383 = vrot.slane %v1376, %v1382
    %v1385 = vadd.f32 %v1366, %v1383
    %v1386 = vxor.u32 %v1385, 2147483648
    %v1387 = vmul.f32 %v1386, 1.442695
    %v1388 = vpow.pop %v1387
    %v1389 = vadd.f32 %v1388, 1.0
    %v1390 = vrcp.pop %v1389
    %v1391 = vmul.f32 1.0, %v1390
    %v1392 = vld [vmem:[#allocation2 + $0x15] ss:$0 sm:$0xff]
    %v1393 = vadd.f32 %v1362, %v251
    %v1394 = vmul.f32 %v1391, %v1393
    %v1395 = vadd.f32 %v1392, %v1394
    %v1396 = vtanh.pop %v1395
    %v1398 = vrot.slane %v1391, 1
    %v1400 = vsub.f32 1.0, %v1398
    %v1401 = vmul.f32 %v1400, %v1396
    %v1402 = vmul.f32 %v1398, %v1223
    %v1403 = vadd.f32 %v1401, %v1402
    %p1404 = scmp.gt.s32.totalorder %s72, 5
    %s1405 = scalar_select %p1404, 1, 0
    %v1406 = vstv %s1405
    %vm1407 = vcmp.eq.s32.totalorder %v1406, 1
    %v1408 = vsel %vm1407, %v1403, %v1223
    %1409 = vmatprep.subr.mxu0 %v253
    %1410 = vmatpush1.msra.mxu0 %v252
    %1411 = vmatprep.subr.mxu0 %v256
    %1412 = vmatpush1.msra.mxu0 %v255
    %1413 = vmatprep.subr.mxu0 %v259
    %1414 = vmatpush1.msra.mxu0 %v258
    %1415 = vmatprep.subr.mxu0 %v262
    %1416 = vmatpush1.msra.mxu0 %v261
    %1417 = vmatprep.subr.mxu0 %v265
    %1418 = vmatpush1.msra.mxu0 %v264
    %1419 = vmatprep.subr.mxu0 %v268
    %1420 = vmatpush1.msra.mxu0 %v267
    %1421 = vmatprep.subr.mxu0 %v271
    %1422 = vmatpush1.msra.mxu0 %v270
    %1423 = vmatprep.subr.mxu0 %v274
    %1424 = vmatpush1.msra.mxu0 %v273
    %1425 = vmatprep.subr.mxu0 %v277
    %1426 = vmatpush1.msra.mxu0 %v276
    %1427 = vmatprep.subr.mxu0 %v280
    %1428 = vmatpush1.msra.mxu0 %v279
    %1429 = vmatprep.subr.mxu0 %v283
    %1430 = vmatpush1.msra.mxu0 %v282
    %1431 = vmatprep.subr.mxu0 %v286
    %1432 = vmatpush1.msra.mxu0 %v285
    %1433 = vmatprep.subr.mxu0 %v289
    %1434 = vmatpush1.msra.mxu0 %v288
    %1435 = vmatprep.subr.mxu0 %v292
    %1436 = vmatpush1.msra.mxu0 %v291
    %1437 = vmatprep.subr.mxu0 %v295
    %1438 = vmatpush1.msra.mxu0 %v294
    %1439 = vmatprep.subr.mxu0 %v298
    %1440 = vmatpush1.msra.mxu0 %v297
    %1441 = vmatprep.subr.mxu0 0.0
    %1442 = vmatpush1.msra.mxu0 0.0
    %1443 = vmatprep.subr.mxu0 0.0
    %1444 = vmatpush1.msra.mxu0 0.0
    %1445 = vmatprep.subr.mxu0 0.0
    %1446 = vmatpush1.msra.mxu0 0.0
    %1447 = vmatprep.subr.mxu0 0.0
    %1448 = vmatpush1.msra.mxu0 0.0
    %1449 = vmatprep.subr.mxu0 0.0
    %1450 = vmatpush1.msra.mxu0 0.0
    %1451 = vmatprep.subr.mxu0 0.0
    %1452 = vmatpush1.msra.mxu0 0.0
    %1453 = vmatprep.subr.mxu0 0.0
    %1454 = vmatpush1.msra.mxu0 0.0
    %1455 = vmatprep.subr.mxu0 0.0
    %1456 = vmatpush1.msra.mxu0 0.0
    %1457 = vmatprep.subr.mxu0 0.0
    %1458 = vmatpush1.msra.mxu0 0.0
    %1459 = vmatprep.subr.mxu0 0.0
    %1460 = vmatpush1.msra.mxu0 0.0
    %1461 = vmatprep.subr.mxu0 0.0
    %1462 = vmatpush1.msra.mxu0 0.0
    %1463 = vmatprep.subr.mxu0 0.0
    %1464 = vmatpush1.msra.mxu0 0.0
    %1465 = vmatprep.subr.mxu0 0.0
    %1466 = vmatpush1.msra.mxu0 0.0
    %1467 = vmatprep.subr.mxu0 0.0
    %1468 = vmatpush1.msra.mxu0 0.0
    %1469 = vmatprep.subr.mxu0 0.0
    %1470 = vmatpush1.msra.mxu0 0.0
    %1471 = vmatprep.subr.mxu0 0.0
    %1472 = vmatpush1.msra.mxu0 0.0
    %1473 = vmatprep.mubr.f32.mxu0 0.0
    %1474 = vmatmul.mubr.f32.gmra.mrb[0].mxu0 %v1408
    %v1475 = vpop.f32.mrb[0].mxu0
    %v1476 = vadd.f32 0.0, %v1475
    %v1477 = vpop.f32.mrb[0].mxu0
    %v1478 = vadd.f32 0.0, %v1477
    %1479 = vdwg.mxu0
    %1480 = vmatprep.subr.mxu0 0.0
    %1481 = vmatpush1.msra.mxu0 %v254
    %1482 = vmatprep.subr.mxu0 0.0
    %1483 = vmatpush1.msra.mxu0 %v257
    %1484 = vmatprep.subr.mxu0 0.0
    %1485 = vmatpush1.msra.mxu0 %v260
    %1486 = vmatprep.subr.mxu0 0.0
    %1487 = vmatpush1.msra.mxu0 %v263
    %1488 = vmatprep.subr.mxu0 0.0
    %1489 = vmatpush1.msra.mxu0 %v266
    %1490 = vmatprep.subr.mxu0 0.0
    %1491 = vmatpush1.msra.mxu0 %v269
    %1492 = vmatprep.subr.mxu0 0.0
    %1493 = vmatpush1.msra.mxu0 %v272
    %1494 = vmatprep.subr.mxu0 0.0
    %1495 = vmatpush1.msra.mxu0 %v275
    %1496 = vmatprep.subr.mxu0 0.0
    %1497 = vmatpush1.msra.mxu0 %v278
    %1498 = vmatprep.subr.mxu0 0.0
    %1499 = vmatpush1.msra.mxu0 %v281
    %1500 = vmatprep.subr.mxu0 0.0
    %1501 = vmatpush1.msra.mxu0 %v284
    %1502 = vmatprep.subr.mxu0 0.0
    %1503 = vmatpush1.msra.mxu0 %v287
    %1504 = vmatprep.subr.mxu0 0.0
    %1505 = vmatpush1.msra.mxu0 %v290
    %1506 = vmatprep.subr.mxu0 0.0
    %1507 = vmatpush1.msra.mxu0 %v293
    %1508 = vmatprep.subr.mxu0 0.0
    %1509 = vmatpush1.msra.mxu0 %v296
    %1510 = vmatprep.subr.mxu0 0.0
    %1511 = vmatpush1.msra.mxu0 %v299
    %1512 = vmatprep.subr.mxu0 0.0
    %1513 = vmatpush1.msra.mxu0 0.0
    %1514 = vmatprep.subr.mxu0 0.0
    %1515 = vmatpush1.msra.mxu0 0.0
    %1516 = vmatprep.subr.mxu0 0.0
    %1517 = vmatpush1.msra.mxu0 0.0
    %1518 = vmatprep.subr.mxu0 0.0
    %1519 = vmatpush1.msra.mxu0 0.0
    %1520 = vmatprep.subr.mxu0 0.0
    %1521 = vmatpush1.msra.mxu0 0.0
    %1522 = vmatprep.subr.mxu0 0.0
    %1523 = vmatpush1.msra.mxu0 0.0
    %1524 = vmatprep.subr.mxu0 0.0
    %1525 = vmatpush1.msra.mxu0 0.0
    %1526 = vmatprep.subr.mxu0 0.0
    %1527 = vmatpush1.msra.mxu0 0.0
    %1528 = vmatprep.subr.mxu0 0.0
    %1529 = vmatpush1.msra.mxu0 0.0
    %1530 = vmatprep.subr.mxu0 0.0
    %1531 = vmatpush1.msra.mxu0 0.0
    %1532 = vmatprep.subr.mxu0 0.0
    %1533 = vmatpush1.msra.mxu0 0.0
    %1534 = vmatprep.subr.mxu0 0.0
    %1535 = vmatpush1.msra.mxu0 0.0
    %1536 = vmatprep.subr.mxu0 0.0
    %1537 = vmatpush1.msra.mxu0 0.0
    %1538 = vmatprep.subr.mxu0 0.0
    %1539 = vmatpush1.msra.mxu0 0.0
    %1540 = vmatprep.subr.mxu0 0.0
    %1541 = vmatpush1.msra.mxu0 0.0
    %1542 = vmatprep.subr.mxu0 0.0
    %1543 = vmatpush1.msra.mxu0 0.0
    %1544 = vmatprep.mubr.f32.mxu0 0.0
    %1545 = vmatmul.mubr.f32.gmra.mrb[0].mxu0 %v1408
    %v1546 = vpop.f32.mrb[0].mxu0
    %v1547 = vadd.f32 0.0, %v1546
    %v1548 = vpop.f32.mrb[0].mxu0
    %1549 = vdwg.mxu0
    %s1550 = scalar_lea.vmem [#allocation2], 6
    %v1551 = vld [vmem:[%s1550] ss:$8 sm:$0x3]
    %v1554 = vcombine.low %v1476, %v1478
    %v1556 = vunpack.c.l.s4 1966171168
    %v1557 = vunpack.c.0.s8 %v1556
    %v1558 = vlaneseq
    %v1559 = vshrl.u32 %v1558, 7
    %v1560 = vsub.s32 %v1557, %v1559
    %v1561 = vrot.slane %v1554, %v1560
    %v1563 = vunpack.c.l.s4 1966171168
    %v1564 = vunpack.c.0.s8 %v1563
    %v1565 = vlaneseq
    %v1566 = vshrl.u32 %v1565, 7
    %v1567 = vsub.s32 %v1564, %v1566
    %v1568 = vrot.slane %v1561, %v1567
    %v1570 = vadd.f32 %v1551, %v1568
    %v1571 = vxor.u32 %v1570, 2147483648
    %v1572 = vmul.f32 %v1571, 1.442695
    %v1573 = vpow.pop %v1572
    %v1574 = vadd.f32 %v1573, 1.0
    %v1575 = vrcp.pop %v1574
    %v1576 = vmul.f32 1.0, %v1575
    %v1577 = vld [vmem:[#allocation2 + $0x16] ss:$0 sm:$0xff]
    %v1578 = vadd.f32 %v1547, %v251
    %v1579 = vmul.f32 %v1576, %v1578
    %v1580 = vadd.f32 %v1577, %v1579
    %v1581 = vtanh.pop %v1580
    %v1583 = vrot.slane %v1576, 1
    %v1585 = vsub.f32 1.0, %v1583
    %v1586 = vmul.f32 %v1585, %v1581
    %v1587 = vmul.f32 %v1583, %v1408
    %v1588 = vadd.f32 %v1586, %v1587
    %p1589 = scmp.gt.s32.totalorder %s72, 6
    %s1590 = scalar_select %p1589, 1, 0
    %v1591 = vstv %s1590
    %vm1592 = vcmp.eq.s32.totalorder %v1591, 1
    %v1593 = vsel %vm1592, %v1588, %v1408
    %1594 = vmatprep.subr.mxu0 %v253
    %1595 = vmatpush1.msra.mxu0 %v252
    %1596 = vmatprep.subr.mxu0 %v256
    %1597 = vmatpush1.msra.mxu0 %v255
    %1598 = vmatprep.subr.mxu0 %v259
    %1599 = vmatpush1.msra.mxu0 %v258
    %1600 = vmatprep.subr.mxu0 %v262
    %1601 = vmatpush1.msra.mxu0 %v261
    %1602 = vmatprep.subr.mxu0 %v265
    %1603 = vmatpush1.msra.mxu0 %v264
    %1604 = vmatprep.subr.mxu0 %v268
    %1605 = vmatpush1.msra.mxu0 %v267
    %1606 = vmatprep.subr.mxu0 %v271
    %1607 = vmatpush1.msra.mxu0 %v270
    %1608 = vmatprep.subr.mxu0 %v274
    %1609 = vmatpush1.msra.mxu0 %v273
    %1610 = vmatprep.subr.mxu0 %v277
    %1611 = vmatpush1.msra.mxu0 %v276
    %1612 = vmatprep.subr.mxu0 %v280
    %1613 = vmatpush1.msra.mxu0 %v279
    %1614 = vmatprep.subr.mxu0 %v283
    %1615 = vmatpush1.msra.mxu0 %v282
    %1616 = vmatprep.subr.mxu0 %v286
    %1617 = vmatpush1.msra.mxu0 %v285
    %1618 = vmatprep.subr.mxu0 %v289
    %1619 = vmatpush1.msra.mxu0 %v288
    %1620 = vmatprep.subr.mxu0 %v292
    %1621 = vmatpush1.msra.mxu0 %v291
    %1622 = vmatprep.subr.mxu0 %v295
    %1623 = vmatpush1.msra.mxu0 %v294
    %1624 = vmatprep.subr.mxu0 %v298
    %1625 = vmatpush1.msra.mxu0 %v297
    %1626 = vmatprep.subr.mxu0 0.0
    %1627 = vmatpush1.msra.mxu0 0.0
    %1628 = vmatprep.subr.mxu0 0.0
    %1629 = vmatpush1.msra.mxu0 0.0
    %1630 = vmatprep.subr.mxu0 0.0
    %1631 = vmatpush1.msra.mxu0 0.0
    %1632 = vmatprep.subr.mxu0 0.0
    %1633 = vmatpush1.msra.mxu0 0.0
    %1634 = vmatprep.subr.mxu0 0.0
    %1635 = vmatpush1.msra.mxu0 0.0
    %1636 = vmatprep.subr.mxu0 0.0
    %1637 = vmatpush1.msra.mxu0 0.0
    %1638 = vmatprep.subr.mxu0 0.0
    %1639 = vmatpush1.msra.mxu0 0.0
    %1640 = vmatprep.subr.mxu0 0.0
    %1641 = vmatpush1.msra.mxu0 0.0
    %1642 = vmatprep.subr.mxu0 0.0
    %1643 = vmatpush1.msra.mxu0 0.0
    %1644 = vmatprep.subr.mxu0 0.0
    %1645 = vmatpush1.msra.mxu0 0.0
    %1646 = vmatprep.subr.mxu0 0.0
    %1647 = vmatpush1.msra.mxu0 0.0
    %1648 = vmatprep.subr.mxu0 0.0
    %1649 = vmatpush1.msra.mxu0 0.0
    %1650 = vmatprep.subr.mxu0 0.0
    %1651 = vmatpush1.msra.mxu0 0.0
    %1652 = vmatprep.subr.mxu0 0.0
    %1653 = vmatpush1.msra.mxu0 0.0
    %1654 = vmatprep.subr.mxu0 0.0
    %1655 = vmatpush1.msra.mxu0 0.0
    %1656 = vmatprep.subr.mxu0 0.0
    %1657 = vmatpush1.msra.mxu0 0.0
    %1658 = vmatprep.mubr.f32.mxu0 0.0
    %1659 = vmatmul.mubr.f32.gmra.mrb[0].mxu0 %v1593
    %v1660 = vpop.f32.mrb[0].mxu0
    %v1661 = vadd.f32 0.0, %v1660
    %v1662 = vpop.f32.mrb[0].mxu0
    %v1663 = vadd.f32 0.0, %v1662
    %1664 = vdwg.mxu0
    %1665 = vmatprep.subr.mxu0 0.0
    %1666 = vmatpush1.msra.mxu0 %v254
    %1667 = vmatprep.subr.mxu0 0.0
    %1668 = vmatpush1.msra.mxu0 %v257
    %1669 = vmatprep.subr.mxu0 0.0
    %1670 = vmatpush1.msra.mxu0 %v260
    %1671 = vmatprep.subr.mxu0 0.0
    %1672 = vmatpush1.msra.mxu0 %v263
    %1673 = vmatprep.subr.mxu0 0.0
    %1674 = vmatpush1.msra.mxu0 %v266
    %1675 = vmatprep.subr.mxu0 0.0
    %1676 = vmatpush1.msra.mxu0 %v269
    %1677 = vmatprep.subr.mxu0 0.0
    %1678 = vmatpush1.msra.mxu0 %v272
    %1679 = vmatprep.subr.mxu0 0.0
    %1680 = vmatpush1.msra.mxu0 %v275
    %1681 = vmatprep.subr.mxu0 0.0
    %1682 = vmatpush1.msra.mxu0 %v278
    %1683 = vmatprep.subr.mxu0 0.0
    %1684 = vmatpush1.msra.mxu0 %v281
    %1685 = vmatprep.subr.mxu0 0.0
    %1686 = vmatpush1.msra.mxu0 %v284
    %1687 = vmatprep.subr.mxu0 0.0
    %1688 = vmatpush1.msra.mxu0 %v287
    %1689 = vmatprep.subr.mxu0 0.0
    %1690 = vmatpush1.msra.mxu0 %v290
    %1691 = vmatprep.subr.mxu0 0.0
    %1692 = vmatpush1.msra.mxu0 %v293
    %1693 = vmatprep.subr.mxu0 0.0
    %1694 = vmatpush1.msra.mxu0 %v296
    %1695 = vmatprep.subr.mxu0 0.0
    %1696 = vmatpush1.msra.mxu0 %v299
    %1697 = vmatprep.subr.mxu0 0.0
    %1698 = vmatpush1.msra.mxu0 0.0
    %1699 = vmatprep.subr.mxu0 0.0
    %1700 = vmatpush1.msra.mxu0 0.0
    %1701 = vmatprep.subr.mxu0 0.0
    %1702 = vmatpush1.msra.mxu0 0.0
    %1703 = vmatprep.subr.mxu0 0.0
    %1704 = vmatpush1.msra.mxu0 0.0
    %1705 = vmatprep.subr.mxu0 0.0
    %1706 = vmatpush1.msra.mxu0 0.0
    %1707 = vmatprep.subr.mxu0 0.0
    %1708 = vmatpush1.msra.mxu0 0.0
    %1709 = vmatprep.subr.mxu0 0.0
    %1710 = vmatpush1.msra.mxu0 0.0
    %1711 = vmatprep.subr.mxu0 0.0
    %1712 = vmatpush1.msra.mxu0 0.0
    %1713 = vmatprep.subr.mxu0 0.0
    %1714 = vmatpush1.msra.mxu0 0.0
    %1715 = vmatprep.subr.mxu0 0.0
    %1716 = vmatpush1.msra.mxu0 0.0
    %1717 = vmatprep.subr.mxu0 0.0
    %1718 = vmatpush1.msra.mxu0 0.0
    %1719 = vmatprep.subr.mxu0 0.0
    %1720 = vmatpush1.msra.mxu0 0.0
    %1721 = vmatprep.subr.mxu0 0.0
    %1722 = vmatpush1.msra.mxu0 0.0
    %1723 = vmatprep.subr.mxu0 0.0
    %1724 = vmatpush1.msra.mxu0 0.0
    %1725 = vmatprep.subr.mxu0 0.0
    %1726 = vmatpush1.msra.mxu0 0.0
    %1727 = vmatprep.subr.mxu0 0.0
    %1728 = vmatpush1.msra.mxu0 0.0
    %1729 = vmatprep.mubr.f32.mxu0 0.0
    %1730 = vmatmul.mubr.f32.gmra.mrb[0].mxu0 %v1593
    %v1731 = vpop.f32.mrb[0].mxu0
    %v1732 = vadd.f32 0.0, %v1731
    %v1733 = vpop.f32.mrb[0].mxu0
    %1734 = vdwg.mxu0
    %s1735 = scalar_lea.vmem [#allocation2], 7
    %v1736 = vld [vmem:[%s1735] ss:$8 sm:$0x3]
    %v1739 = vcombine.low %v1661, %v1663
    %v1741 = vunpack.c.l.s4 1966171168
    %v1742 = vunpack.c.0.s8 %v1741
    %v1743 = vlaneseq
    %v1744 = vshrl.u32 %v1743, 7
    %v1745 = vsub.s32 %v1742, %v1744
    %v1746 = vrot.slane %v1739, %v1745
    %v1748 = vunpack.c.l.s4 1966171168
    %v1749 = vunpack.c.0.s8 %v1748
    %v1750 = vlaneseq
    %v1751 = vshrl.u32 %v1750, 7
    %v1752 = vsub.s32 %v1749, %v1751
    %v1753 = vrot.slane %v1746, %v1752
    %v1755 = vadd.f32 %v1736, %v1753
    %v1756 = vxor.u32 %v1755, 2147483648
    %v1757 = vmul.f32 %v1756, 1.442695
    %v1758 = vpow.pop %v1757
    %v1759 = vadd.f32 %v1758, 1.0
    %v1760 = vrcp.pop %v1759
    %v1761 = vmul.f32 1.0, %v1760
    %v1762 = vld [vmem:[#allocation2 + $0x17] ss:$0 sm:$0xff]
    %v1763 = vadd.f32 %v1732, %v251
    %v1764 = vmul.f32 %v1761, %v1763
    %v1765 = vadd.f32 %v1762, %v1764
    %v1766 = vtanh.pop %v1765
    %v1768 = vrot.slane %v1761, 1
    %v1770 = vsub.f32 1.0, %v1768
    %v1771 = vmul.f32 %v1770, %v1766
    %v1772 = vmul.f32 %v1768, %v1593
    %v1773 = vadd.f32 %v1771, %v1772
    %p1774 = scmp.gt.s32.totalorder %s72, 7
    %s1775 = scalar_select %p1774, 1, 0
    %v1776 = vstv %s1775
    %vm1777 = vcmp.eq.s32.totalorder %v1776, 1
    %v1778 = vsel %vm1777, %v1773, %v1593
    %v1779 = vld [vmem:[%s6] sm:$0x1]
    %v1780 = vmul.f32 %v1778, %v1779
    %vm1781 = vcmask 1040384
    %v1782 = vsel %vm1781, %v1780, 0.0
    %1783 = vadd.xlane.f32.xlu0 %v1782
    %v1784 = vpop.xlane.xlu0 %1783
    %v1785 = vld [vmem:[#allocation4] sm:$0x1]
    %v1786 = vadd.f32 %v1784, %v1785
    %vm1787 = vcmask 0
    %1788 = vst.msk [vmem:[#allocation11] sm:$0x1] %vm1787, %v1786
    // Predicated region
    $region46: #{_run_gru_value.1} parent=1 // pred_check
      _
    $region47: #{_run_gru_value.1} parent=1 // pred_check_branch
      %1790 = sbr.rel (0) target = $region49
    $region48: #{_run_gru_value.1} parent=1 // pred_region
      %s1792 = ssub.s32 16, 16
      %1793 = vsyncadd [#allocation7], %s1792
      %s1795 = sshll.u32 [#allocation11], 4
      %s1796 = int_to_ptr.vmem [resolvable:$true] %s1795
      %1798 = dma.vmem_to_hbm [thread:$0]  %s1796, 16, %s8, [#allocation7]
    $region49: #{_run_gru_value.1} parent=1 // pred_fallthru
      _
    // Predicated region
    $region50: #{_run_gru_value.1} parent=1 // pred_check
      _
    $region51: #{_run_gru_value.1} parent=1 // pred_check_branch
      %1800 = sbr.rel (0) target = $region53
    $region52: #{_run_gru_value.1} parent=1 // pred_region
      %1801 = dma.done [#allocation7], 16
    $region53: #{_run_gru_value.1} parent=1 // pred_fallthru
      _
    %1802 = vsyncpa [#allocation6], 1
    %1803 = vsyncpa [#allocation9], 1
    %1804 = vsyncpa [#allocation7], 1

</llo_original>
